<compile_context>
chip_gen: v7x
topology: tpu7x:2x2x1
jax: 0.10.0
libtpu: 0.0.40
codegen_flags: <defaults>
</compile_context>

<pallas_src>
import jax
import jax.numpy as jnp
from jax.experimental import pallas as pl
from jax.experimental.pallas import tpu as pltpu

# Raise the scoped VMEM limit (defaults: 16 MiB v5e, 32 MiB v6e/v7x) but stay
# well under v7x's 64 MiB physical VMEM.
_VMEM_LIMIT_BYTES = 48 * 1024 * 1024
# Per-step working-set budget used to auto-size the row tile.
_DEFAULT_TILE_BUDGET = 20 * 1024 * 1024


# ----------------------------------------------------------------------------
# Helpers: VMEM footprint ((8,128)-padded) and row-tile selection.
# ----------------------------------------------------------------------------
def _vmem_bytes(shape, itemsize=4):
    if len(shape) == 0:
        return itemsize
    if len(shape) == 1:
        sub, lane, lead = 1, int(shape[0]), 1
    else:
        sub, lane = int(shape[-2]), int(shape[-1])
        lead = 1
        for d in shape[:-2]:
            lead *= int(d)
    sub_p = -(-sub // 8) * 8
    lane_p = -(-lane // 128) * 128
    return lead * sub_p * lane_p * itemsize


def _pick_rows(n_rows, tile_bytes_fn, budget, min_tile=1):
    """Largest divisor of n_rows (>= min_tile) whose working set fits budget."""
    divs = [t for t in range(1, n_rows + 1) if n_rows % t == 0 and t >= min_tile]
    if not divs:
        return n_rows
    fitting = [t for t in divs if tile_bytes_fn(t) <= budget]
    return max(fitting) if fitting else min(divs)


# ----------------------------------------------------------------------------
# Kernel A: fused 1x1 conv + bilinear 2x upsample (align_corners=False)
# ----------------------------------------------------------------------------
def _conv_upsample_kernel(xb_ref, xt_ref, xbt_ref, w_ref, o_ref, cpad_ref):
    """One (batch, row-band) step.

    xb_ref : (1, T, W, Cin)   body rows of the input band
    xt_ref : (1, 1, W, Cin)   row above the band (edge-clamped index)
    xbt_ref: (1, 1, W, Cin)   row below the band (edge-clamped index)
    w_ref  : (Cin, Cout)      1x1 conv weight
    o_ref  : (1, T, 2, W, 2*Cout)  folded output; free reshape to (2T, 2W, Cout)
    cpad_ref: VMEM (T+2, W+2, Cout) edge-clamp padded post-conv band
    """
    T = xb_ref.shape[1]
    W = xb_ref.shape[2]
    cin = xb_ref.shape[3]
    cout = w_ref.shape[1]
    f32 = jnp.float32
    w = w_ref[...].astype(f32)

    def pw(rows):  # (n, W, cin) -> (n, W, cout): the fused 1x1 conv
        n = rows.shape[0]
        y = jnp.dot(rows.reshape(n * W, cin).astype(f32), w,
                    preferred_element_type=f32)
        return y.reshape(n, W, cout)

    # 1x1 conv into an edge-clamp padded scratch.  The conv is pointwise, so
    # conv(clamped row) == clamped row of the conv output.
    cpad_ref[pl.ds(1, T), pl.ds(1, W), :] = pw(xb_ref[0])
    cpad_ref[pl.ds(0, 1), pl.ds(1, W), :] = pw(xt_ref[0])
    cpad_ref[pl.ds(T + 1, 1), pl.ds(1, W), :] = pw(xbt_ref[0])
    cpad_ref[:, pl.ds(0, 1), :] = cpad_ref[:, pl.ds(1, 1), :]
    cpad_ref[:, pl.ds(W + 1, 1), :] = cpad_ref[:, pl.ds(W, 1), :]

    cp = cpad_ref[...]
    # Separable bilinear blend: vertical 0.75/0.25 then horizontal 0.75/0.25.
    c75 = 0.75 * cp[1:T + 1]
    v_e = c75 + 0.25 * cp[0:T]          # even output rows
    v_o = c75 + 0.25 * cp[2:T + 2]      # odd output rows

    dt = o_ref.dtype

    def store_phase(p, v):              # v: (T, W+2, Cout)
        mid = 0.75 * v[:, 1:W + 1]
        # W-phase folded onto the lane axis: cols [0:C] = even, [C:2C] = odd.
        o_ref[0, :, p, :, 0:cout] = (mid + 0.25 * v[:, 0:W]).astype(dt)
        o_ref[0, :, p, :, cout:2 * cout] = (mid + 0.25 * v[:, 2:W + 2]).astype(dt)

    store_phase(0, v_e)
    store_phase(1, v_o)


def fused_conv_upsample(x, w_conv, *, tile_rows=None,
                        vmem_budget=_DEFAULT_TILE_BUDGET):
    """x: (B,H,W,Cin) NHWC, w_conv: (Cin,Cout) -> (B,2H,2W,Cout)."""
    B, H, W, Cin = x.shape
    Cout = w_conv.shape[1]

    if tile_rows is None:
        def tile_bytes(t):
            return (2 * _vmem_bytes((t, W, Cin))             # input block x2 buffers
                    + 2 * _vmem_bytes((t, 2, W, 2 * Cout))   # output block x2 buffers
                    + _vmem_bytes((t + 2, W + 2, Cout))      # cpad scratch
                    + 6 * _vmem_bytes((t, W + 2, Cout)))     # blend temporaries
        T = _pick_rows(H, tile_bytes, vmem_budget)
    else:
        T = int(tile_rows)
    assert H % T == 0, (H, T)
    R = H // T

    body_spec = pl.BlockSpec((1, T, W, Cin), lambda b, r: (b, r, 0, 0))
    top_spec = pl.BlockSpec(
        (1, 1, W, Cin), lambda b, r: (b, jnp.maximum(r * T - 1, 0), 0, 0))
    bot_spec = pl.BlockSpec(
        (1, 1, W, Cin), lambda b, r: (b, jnp.minimum(r * T + T, H - 1), 0, 0))
    w_spec = pl.BlockSpec((Cin, Cout), lambda b, r: (0, 0))

    out = pl.pallas_call(
        _conv_upsample_kernel,
        out_shape=jax.ShapeDtypeStruct((B, H, 2, W, 2 * Cout), x.dtype),
        grid=(B, R),
        in_specs=[body_spec, top_spec, bot_spec, w_spec],
        out_specs=pl.BlockSpec((1, T, 2, W, 2 * Cout),
                               lambda b, r: (b, r, 0, 0, 0)),
        scratch_shapes=[pltpu.VMEM((T + 2, W + 2, Cout), jnp.float32)],
        compiler_params=pltpu.CompilerParams(
            dimension_semantics=("parallel", "parallel"),
            vmem_limit_bytes=_VMEM_LIMIT_BYTES),
    )(x, x, x, w_conv)
    # Free row-major reshape: (B, H, 2, W, 2C) == (B, 2H, 2W, C).
    return out.reshape(B, 2 * H, 2 * W, Cout)


# ----------------------------------------------------------------------------
# Kernel B: BOTH residual blocks fused (2-row halo, resblock1 recomputed on it)
#   resblock(x) = x + conv1x1(relu(conv3x3(relu(conv1x1(x)))))   [pad=1]
# ----------------------------------------------------------------------------
def _double_resblock_kernel(xb_ref, xm2_ref, xm1_ref, xp1_ref, xp2_ref,
                            w1a_ref, w1b_ref, w1c_ref,
                            w2a_ref, w2b_ref, w2c_ref,
                            o_ref, t1pad_ref, t2pad_ref, cols_ref):
    """One (batch, row-band) step over rows [a, a+T), a = r*T.

    xb_ref  : (1, T, W, C)    body rows
    xm2/xm1 : (1, 1, W, C)    rows a-2, a-1 (edge-clamped indices)
    xp1/xp2 : (1, 1, W, C)    rows a+T, a+T+1 (edge-clamped indices)
    w*a     : (C, HID)        first 1x1 of each block
    w*b     : (9*HID, HID)    3x3 (HWIO) flattened for im2col
    w*c     : (HID, C)        last 1x1 of each block
    o_ref   : (1, T, W, C)
    t1pad   : VMEM (T+4, W+2, HID)   zero-padded hidden of resblock1
    t2pad   : VMEM (T+2, W+2, HID)   zero-padded hidden of resblock2
    cols    : VMEM (T+2, W, 9*HID)   im2col tile (reused by both blocks)
    """
    T = xb_ref.shape[1]
    W = xb_ref.shape[2]
    c = xb_ref.shape[3]
    hid = w1a_ref.shape[1]
    r = pl.program_id(1)
    nr = pl.num_programs(1)
    f32 = jnp.float32

    w1a = w1a_ref[...].astype(f32)
    w2a = w2a_ref[...].astype(f32)

    def pw(rows, w):  # (n, W, ci) @ (ci, co) -> (n, W, co)
        n = rows.shape[0]
        y = jnp.dot(rows.reshape(n * W, rows.shape[2]).astype(f32), w,
                    preferred_element_type=f32)
        return y.reshape(n, W, w.shape[1])

    def relu(v):
        return jnp.maximum(v, 0.0)

    xb = xb_ref[0].astype(f32)
    xm1 = xm1_ref[0].astype(f32)
    xp1 = xp1_ref[0].astype(f32)

    # ---- resblock1 hidden, zero-padded, on rows [a-2, a+T+1] -> t1pad -------
    t1pad_ref[:, pl.ds(0, 1), :] = jnp.zeros((T + 4, 1, hid), f32)
    t1pad_ref[:, pl.ds(W + 1, 1), :] = jnp.zeros((T + 4, 1, hid), f32)
    t1pad_ref[pl.ds(2, T), pl.ds(1, W), :] = relu(pw(xb, w1a))

    @pl.when(r == 0)                      # image top: 3x3 zero padding
    def _():
        t1pad_ref[pl.ds(0, 2), pl.ds(1, W), :] = jnp.zeros((2, W, hid), f32)

    @pl.when(r > 0)                       # interior: real rows a-2, a-1
    def _():
        t1pad_ref[pl.ds(0, 1), pl.ds(1, W), :] = relu(pw(xm2_ref[0].astype(f32), w1a))
        t1pad_ref[pl.ds(1, 1), pl.ds(1, W), :] = relu(pw(xm1, w1a))

    @pl.when(r == nr - 1)                 # image bottom
    def _():
        t1pad_ref[pl.ds(T + 2, 2), pl.ds(1, W), :] = jnp.zeros((2, W, hid), f32)

    @pl.when(r < nr - 1)
    def _():
        t1pad_ref[pl.ds(T + 2, 1), pl.ds(1, W), :] = relu(pw(xp1, w1a))
        t1pad_ref[pl.ds(T + 3, 1), pl.ds(1, W), :] = relu(pw(xp2_ref[0].astype(f32), w1a))

    # ---- resblock1 3x3 as ONE im2col matmul (K = 9*hid), rows [a-1, a+T] ----
    for k in range(9):
        dy, dx = divmod(k, 3)
        cols_ref[:, :, pl.ds(k * hid, hid)] = \
            t1pad_ref[pl.ds(dy, T + 2), pl.ds(dx, W), :]
    h1 = relu(jnp.dot(cols_ref[...].reshape((T + 2) * W, 9 * hid),
                      w1b_ref[...].astype(f32), preferred_element_type=f32))
    x_win = jnp.concatenate([xm1, xb, xp1], axis=0)          # rows [a-1, a+T]
    y1 = (x_win.reshape((T + 2) * W, c)
          + jnp.dot(h1, w1c_ref[...].astype(f32), preferred_element_type=f32))
    y1 = y1.reshape(T + 2, W, c)
    # Note: at the image borders the window rows a-1 / a+T of y1 are not real
    # rows; they only feed t2pad rows that pl.when zeroes below.

    # ---- resblock2 hidden, zero-padded, on rows [a-1, a+T] -> t2pad ---------
    t2pad_ref[:, pl.ds(0, 1), :] = jnp.zeros((T + 2, 1, hid), f32)
    t2pad_ref[:, pl.ds(W + 1, 1), :] = jnp.zeros((T + 2, 1, hid), f32)
    t2pad_ref[pl.ds(0, T + 2), pl.ds(1, W), :] = relu(pw(y1, w2a))

    @pl.when(r == 0)
    def _():
        t2pad_ref[pl.ds(0, 1), pl.ds(1, W), :] = jnp.zeros((1, W, hid), f32)

    @pl.when(r == nr - 1)
    def _():
        t2pad_ref[pl.ds(T + 1, 1), pl.ds(1, W), :] = jnp.zeros((1, W, hid), f32)

    # ---- resblock2 3x3 im2col + 1x1 + skip ----------------------------------
    for k in range(9):
        dy, dx = divmod(k, 3)
        cols_ref[pl.ds(0, T), :, pl.ds(k * hid, hid)] = \
            t2pad_ref[pl.ds(dy, T), pl.ds(dx, W), :]
    h2 = relu(jnp.dot(cols_ref[pl.ds(0, T)].reshape(T * W, 9 * hid),
                      w2b_ref[...].astype(f32), preferred_element_type=f32))
    y2 = (y1[1:T + 1].reshape(T * W, c)
          + jnp.dot(h2, w2c_ref[...].astype(f32), preferred_element_type=f32))
    o_ref[0] = y2.reshape(T, W, c).astype(o_ref.dtype)


def fused_double_resblock(x, w1a, w1b, w1c, w2a, w2b, w2c, *, tile_rows=None,
                          vmem_budget=_DEFAULT_TILE_BUDGET):
    """Both residual blocks in one pallas_call.  x: (B,H,W,C) -> (B,H,W,C)."""
    B, H, W, C = x.shape
    HID = w1a.shape[1]
    w1b_flat = jnp.reshape(w1b, (9 * HID, HID))   # (ky, kx, i) row-major
    w2b_flat = jnp.reshape(w2b, (9 * HID, HID))

    if tile_rows is None:
        def tile_bytes(t):
            return (4 * _vmem_bytes((t, W, C))                # in+out blocks, 2 buffers
                    + _vmem_bytes((t + 4, W + 2, HID))        # t1pad
                    + _vmem_bytes((t + 2, W + 2, HID))        # t2pad
                    + _vmem_bytes((t + 2, W, 9 * HID))        # im2col tile
                    + 2 * _vmem_bytes(((t + 2) * W, HID))     # matmul results
                    + 2 * _vmem_bytes((t + 2, W, C)))         # y1 / x_win
        T = _pick_rows(H, tile_bytes, vmem_budget, min_tile=2)
    else:
        T = int(tile_rows)
    assert H % T == 0, (H, T)
    R = H // T
    assert R == 1 or T >= 2, "row tile must be >= 2 when the image is split"

    body = pl.BlockSpec((1, T, W, C), lambda b, r: (b, r, 0, 0))

    def row_spec(fn):
        return pl.BlockSpec((1, 1, W, C), lambda b, r: (b, fn(r), 0, 0))

    m2 = row_spec(lambda r: jnp.maximum(r * T - 2, 0))
    m1 = row_spec(lambda r: jnp.maximum(r * T - 1, 0))
    p1 = row_spec(lambda r: jnp.minimum(r * T + T, H - 1))
    p2 = row_spec(lambda r: jnp.minimum(r * T + T + 1, H - 1))

    def wmat(shape):
        return pl.BlockSpec(shape, lambda b, r: (0, 0))

    return pl.pallas_call(
        _double_resblock_kernel,
        out_shape=jax.ShapeDtypeStruct((B, H, W, C), x.dtype),
        grid=(B, R),
        in_specs=[body, m2, m1, p1, p2,
                  wmat((C, HID)), wmat((9 * HID, HID)), wmat((HID, C)),
                  wmat((C, HID)), wmat((9 * HID, HID)), wmat((HID, C))],
        out_specs=pl.BlockSpec((1, T, W, C), lambda b, r: (b, r, 0, 0)),
        scratch_shapes=[pltpu.VMEM((T + 4, W + 2, HID), jnp.float32),
                        pltpu.VMEM((T + 2, W + 2, HID), jnp.float32),
                        pltpu.VMEM((T + 2, W, 9 * HID), jnp.float32)],
        compiler_params=pltpu.CompilerParams(
            dimension_semantics=("parallel", "parallel"),
            vmem_limit_bytes=_VMEM_LIMIT_BYTES),
    )(x, x, x, x, x, w1a, w1b_flat, w1c, w2a, w2b_flat, w2c)


# ----------------------------------------------------------------------------
# Full GBlock forward
# ----------------------------------------------------------------------------
def gblock_forward(x_nchw, params, *, tile_rows_up=None, tile_rows_res=None):
    """x_nchw: (B, Cin, H, W) -> (B, Cout, 2H, 2W)."""
    # NCHW <-> NHWC transposes kept only to match the PyTorch interface.
    x = jnp.transpose(x_nchw, (0, 2, 3, 1))
    x = fused_conv_upsample(x, params["w_conv"], tile_rows=tile_rows_up)
    x = fused_double_resblock(x, params["w1a"], params["w1b"], params["w1c"],
                              params["w2a"], params["w2b"], params["w2c"],
                              tile_rows=tile_rows_res)
    return jnp.transpose(x, (0, 3, 1, 2))


# ----------------------------------------------------------------------------
# Pure-JAX reference (correctness check)
# ----------------------------------------------------------------------------
def _ref_pw(x, w):
    return jnp.einsum("bhwi,io->bhwo", x, w)


def _ref_conv3x3(x, w):
    return jax.lax.conv_general_dilated(
        x, w, (1, 1), "SAME", dimension_numbers=("NHWC", "HWIO", "NHWC"))


def _ref_upsample(x):
    B, H, W, C = x.shape
    xp = jnp.pad(x, ((0, 0), (1, 1), (1, 1), (0, 0)), mode="edge")

    def s(di, dj):
        return xp[:, di:di + H, dj:dj + W, :]

    c = s(1, 1)
    um, dp, lm, rp = s(0, 1), s(2, 1), s(1, 0), s(1, 2)
    ul, ur, dl, dr = s(0, 0), s(0, 2), s(2, 0), s(2, 2)
    ee = 0.5625 * c + 0.1875 * um + 0.1875 * lm + 0.0625 * ul
    eo = 0.5625 * c + 0.1875 * um + 0.1875 * rp + 0.0625 * ur
    oe = 0.5625 * c + 0.1875 * dp + 0.1875 * lm + 0.0625 * dl
    oo = 0.5625 * c + 0.1875 * dp + 0.1875 * rp + 0.0625 * dr
    out = jnp.stack([jnp.stack([ee, eo], axis=3),
                     jnp.stack([oe, oo], axis=3)], axis=2)  # (B,H,2,W,2,C)
    return out.reshape(B, 2 * H, 2 * W, C)


def gblock_reference(x_nchw, params):
    x = jnp.transpose(x_nchw, (0, 2, 3, 1))
    x = _ref_pw(x, params["w_conv"])
    x = _ref_upsample(x)
    for a, b, c in (("w1a", "w1b", "w1c"), ("w2a", "w2b", "w2c")):
        t = jax.nn.relu(_ref_pw(x, params[a]))
        t = jax.nn.relu(_ref_conv3x3(t, params[b]))
        x = x + _ref_pw(t, params[c])
    return jnp.transpose(x, (0, 3, 1, 2))


# ----------------------------------------------------------------------------
if __name__ == "__main__":
    B, C_IN, C_OUT, H, W = 2, 4, 8, 16, 16
    HIDDEN = 3 * C_OUT

    key = jax.random.PRNGKey(0)
    keys = jax.random.split(key, 8)

    def msr(k, shape, fan_in):
        # MSR / He init: N(0, 2 / fan_in), deterministic per key.
        return jax.random.normal(k, shape, jnp.float32) * jnp.sqrt(2.0 / fan_in)

    x = jax.random.normal(keys[0], (B, C_IN, H, W), jnp.float32)

    params = {
        "w_conv": msr(keys[1], (C_IN, C_OUT), C_IN),              # 1x1
        "w1a": msr(keys[2], (C_OUT, HIDDEN), C_OUT),              # 1x1
        "w1b": msr(keys[3], (3, 3, HIDDEN, HIDDEN), 9 * HIDDEN),  # 3x3 HWIO
        "w1c": msr(keys[4], (HIDDEN, C_OUT), HIDDEN),             # 1x1
        "w2a": msr(keys[5], (C_OUT, HIDDEN), C_OUT),
        "w2b": msr(keys[6], (3, 3, HIDDEN, HIDDEN), 9 * HIDDEN),
        "w2c": msr(keys[7], (HIDDEN, C_OUT), HIDDEN),
    }

    ref = jax.block_until_ready(gblock_reference(x, params))

    # Small explicit tiles -> multiple row bands per image, exercising the
    # interior-halo / pl.when edge paths of both kernels.
    out = jax.block_until_ready(
        gblock_forward(x, params, tile_rows_up=4, tile_rows_res=8))
    assert out.shape == (B, C_OUT, 2 * H, 2 * W), out.shape
    assert jnp.allclose(out, ref, atol=1e-4, rtol=1e-4), (
        float(jnp.max(jnp.abs(out - ref))))

    # Auto (VMEM-budget) tiles: a whole image per grid step at this size.
    out2 = jax.block_until_ready(gblock_forward(x, params))
    assert jnp.allclose(out2, ref, atol=1e-4, rtol=1e-4), (
        float(jnp.max(jnp.abs(out2 - ref))))

    print("KERNEL_OK")
</pallas_src>

<mosaic_0001>
module attributes {stable_mosaic.version = 11 : i64} {
  func.func @_conv_upsample_kernel(%arg0: i32, %arg1: i32, %arg2: memref<1x4x16x4xf32, #tpu.memory_space<vmem>>, %arg3: memref<1x1x16x4xf32, #tpu.memory_space<vmem>>, %arg4: memref<1x1x16x4xf32, #tpu.memory_space<vmem>>, %arg5: memref<4x8xf32, #tpu.memory_space<vmem>>, %arg6: memref<1x4x2x16x16xf32, #tpu.memory_space<vmem>>, %arg7: memref<6x18x8xf32, #tpu.memory_space<vmem>>) attributes {dimension_semantics = [#tpu.dimension_semantics<parallel>, #tpu.dimension_semantics<parallel>], iteration_bounds = array<i64: 2, 4>, scalar_prefetch = 0 : i64, scratch_operands = 1 : i64, tpu.core_type = #tpu.core_type<tc>, window_params = [{transform_indices = @transform_0, window_bounds = array<i64: 1, 4, 16, 4>}, {transform_indices = @transform_1, window_bounds = array<i64: 1, 1, 16, 4>}, {transform_indices = @transform_2, window_bounds = array<i64: 1, 1, 16, 4>}, {pipeline_mode = #tpu.pipeline_mode<synchronous>, transform_indices = @transform_3, window_bounds = array<i64: 4, 8>}, {transform_indices = @transform_4, window_bounds = array<i64: 1, 4, 2, 16, 16>}]} {
    %c0 = arith.constant 0 : index
    %c0_0 = arith.constant 0 : index
    %0 = vector.load %arg5[%c0, %c0_0] : memref<4x8xf32, #tpu.memory_space<vmem>>, vector<4x8xf32>
    %c0_1 = arith.constant 0 : index
    %c0_2 = arith.constant 0 : index
    %c0_3 = arith.constant 0 : index
    %c0_4 = arith.constant 0 : index
    %1 = vector.load %arg2[%c0_1, %c0_2, %c0_3, %c0_4] : memref<1x4x16x4xf32, #tpu.memory_space<vmem>>, vector<1x4x16x4xf32>
    %2 = vector.shape_cast %1 : vector<1x4x16x4xf32> to vector<4x16x4xf32>
    %3 = vector.shape_cast %2 : vector<4x16x4xf32> to vector<64x4xf32>
    %cst = arith.constant dense<0.000000e+00> : vector<64x8xf32>
    %4 = tpu.matmul %3, %0, %cst {dimension_numbers = #tpu.dot_dimension_numbers<[1], [0], [0], [1], [0, 0, 1, 1], [], []>} : vector<64x4xf32>, vector<4x8xf32>, vector<64x8xf32> -> vector<64x8xf32>
    %5 = vector.shape_cast %4 : vector<64x8xf32> to vector<4x16x8xf32>
    %c1 = arith.constant 1 : index
    %c1_5 = arith.constant 1 : index
    %c0_6 = arith.constant 0 : index
    %6 = vector.load %arg7[%c1, %c1_5, %c0_6] : memref<6x18x8xf32, #tpu.memory_space<vmem>>, vector<4x16x8xf32>
    tpu.vector_store %arg7[%c1, %c1_5, %c0_6], %5 {strides = array<i32>} : memref<6x18x8xf32, #tpu.memory_space<vmem>>, vector<4x16x8xf32>,
    %c0_7 = arith.constant 0 : index
    %c0_8 = arith.constant 0 : index
    %c0_9 = arith.constant 0 : index
    %c0_10 = arith.constant 0 : index
    %7 = vector.load %arg3[%c0_7, %c0_8, %c0_9, %c0_10] : memref<1x1x16x4xf32, #tpu.memory_space<vmem>>, vector<1x1x16x4xf32>
    %8 = vector.shape_cast %7 : vector<1x1x16x4xf32> to vector<1x16x4xf32>
    %9 = vector.shape_cast %8 : vector<1x16x4xf32> to vector<16x4xf32>
    %cst_11 = arith.constant dense<0.000000e+00> : vector<16x8xf32>
    %10 = tpu.matmul %9, %0, %cst_11 {dimension_numbers = #tpu.dot_dimension_numbers<[1], [0], [0], [1], [0, 0, 1, 1], [], []>} : vector<16x4xf32>, vector<4x8xf32>, vector<16x8xf32> -> vector<16x8xf32>
    %11 = vector.shape_cast %10 : vector<16x8xf32> to vector<1x16x8xf32>
    %c0_12 = arith.constant 0 : index
    %c1_13 = arith.constant 1 : index
    %c0_14 = arith.constant 0 : index
    %12 = vector.load %arg7[%c0_12, %c1_13, %c0_14] : memref<6x18x8xf32, #tpu.memory_space<vmem>>, vector<1x16x8xf32>
    tpu.vector_store %arg7[%c0_12, %c1_13, %c0_14], %11 {strides = array<i32>} : memref<6x18x8xf32, #tpu.memory_space<vmem>>, vector<1x16x8xf32>,
    %c0_15 = arith.constant 0 : index
    %c0_16 = arith.constant 0 : index
    %c0_17 = arith.constant 0 : index
    %c0_18 = arith.constant 0 : index
    %13 = vector.load %arg4[%c0_15, %c0_16, %c0_17, %c0_18] : memref<1x1x16x4xf32, #tpu.memory_space<vmem>>, vector<1x1x16x4xf32>
    %14 = vector.shape_cast %13 : vector<1x1x16x4xf32> to vector<1x16x4xf32>
    %15 = vector.shape_cast %14 : vector<1x16x4xf32> to vector<16x4xf32>
    %cst_19 = arith.constant dense<0.000000e+00> : vector<16x8xf32>
    %16 = tpu.matmul %15, %0, %cst_19 {dimension_numbers = #tpu.dot_dimension_numbers<[1], [0], [0], [1], [0, 0, 1, 1], [], []>} : vector<16x4xf32>, vector<4x8xf32>, vector<16x8xf32> -> vector<16x8xf32>
    %17 = vector.shape_cast %16 : vector<16x8xf32> to vector<1x16x8xf32>
    %c5 = arith.constant 5 : index
    %c1_20 = arith.constant 1 : index
    %c0_21 = arith.constant 0 : index
    %18 = vector.load %arg7[%c5, %c1_20, %c0_21] : memref<6x18x8xf32, #tpu.memory_space<vmem>>, vector<1x16x8xf32>
    tpu.vector_store %arg7[%c5, %c1_20, %c0_21], %17 {strides = array<i32>} : memref<6x18x8xf32, #tpu.memory_space<vmem>>, vector<1x16x8xf32>,
    %c0_22 = arith.constant 0 : index
    %c1_23 = arith.constant 1 : index
    %c0_24 = arith.constant 0 : index
    %19 = vector.load %arg7[%c0_22, %c1_23, %c0_24] : memref<6x18x8xf32, #tpu.memory_space<vmem>>, vector<6x1x8xf32>
    %c0_25 = arith.constant 0 : index
    %c0_26 = arith.constant 0 : index
    %c0_27 = arith.constant 0 : index
    %20 = vector.load %arg7[%c0_25, %c0_26, %c0_27] : memref<6x18x8xf32, #tpu.memory_space<vmem>>, vector<6x1x8xf32>
    tpu.vector_store %arg7[%c0_25, %c0_26, %c0_27], %19 {strides = array<i32>} : memref<6x18x8xf32, #tpu.memory_space<vmem>>, vector<6x1x8xf32>,
    %c0_28 = arith.constant 0 : index
    %c16 = arith.constant 16 : index
    %c0_29 = arith.constant 0 : index
    %21 = vector.load %arg7[%c0_28, %c16, %c0_29] : memref<6x18x8xf32, #tpu.memory_space<vmem>>, vector<6x1x8xf32>
    %c0_30 = arith.constant 0 : index
    %c17 = arith.constant 17 : index
    %c0_31 = arith.constant 0 : index
    %22 = vector.load %arg7[%c0_30, %c17, %c0_31] : memref<6x18x8xf32, #tpu.memory_space<vmem>>, vector<6x1x8xf32>
    tpu.vector_store %arg7[%c0_30, %c17, %c0_31], %21 {strides = array<i32>} : memref<6x18x8xf32, #tpu.memory_space<vmem>>, vector<6x1x8xf32>,
    %c0_32 = arith.constant 0 : index
    %c0_33 = arith.constant 0 : index
    %c0_34 = arith.constant 0 : index
    %23 = vector.load %arg7[%c0_32, %c0_33, %c0_34] : memref<6x18x8xf32, #tpu.memory_space<vmem>>, vector<6x18x8xf32>
    %24 = vector.extract_strided_slice %23 {offsets = [1, 0, 0], sizes = [4, 18, 8], strides = [1, 1, 1]} : vector<6x18x8xf32> to vector<4x18x8xf32>
    %cst_35 = arith.constant 7.500000e-01 : f32
    %25 = vector.broadcast %cst_35 : f32 to vector<4x18x8xf32>
    %26 = arith.mulf %25, %24 : vector<4x18x8xf32>
    %27 = vector.extract_strided_slice %23 {offsets = [0, 0, 0], sizes = [4, 18, 8], strides = [1, 1, 1]} : vector<6x18x8xf32> to vector<4x18x8xf32>
    %cst_36 = arith.constant 2.500000e-01 : f32
    %28 = vector.broadcast %cst_36 : f32 to vector<4x18x8xf32>
    %29 = arith.mulf %28, %27 : vector<4x18x8xf32>
    %30 = arith.addf %26, %29 : vector<4x18x8xf32>
    %31 = vector.extract_strided_slice %23 {offsets = [2, 0, 0], sizes = [4, 18, 8], strides = [1, 1, 1]} : vector<6x18x8xf32> to vector<4x18x8xf32>
    %cst_37 = arith.constant 2.500000e-01 : f32
    %32 = vector.broadcast %cst_37 : f32 to vector<4x18x8xf32>
    %33 = arith.mulf %32, %31 : vector<4x18x8xf32>
    %34 = arith.addf %26, %33 : vector<4x18x8xf32>
    %35 = vector.extract_strided_slice %30 {offsets = [0, 1, 0], sizes = [4, 16, 8], strides = [1, 1, 1]} : vector<4x18x8xf32> to vector<4x16x8xf32>
    %cst_38 = arith.constant 7.500000e-01 : f32
    %36 = vector.broadcast %cst_38 : f32 to vector<4x16x8xf32>
    %37 = arith.mulf %36, %35 : vector<4x16x8xf32>
    %38 = vector.extract_strided_slice %30 {offsets = [0, 0, 0], sizes = [4, 16, 8], strides = [1, 1, 1]} : vector<4x18x8xf32> to vector<4x16x8xf32>
    %cst_39 = arith.constant 2.500000e-01 : f32
    %39 = vector.broadcast %cst_39 : f32 to vector<4x16x8xf32>
    %40 = arith.mulf %39, %38 : vector<4x16x8xf32>
    %41 = arith.addf %37, %40 : vector<4x16x8xf32>
    %c0_40 = arith.constant 0 : index
    %c0_41 = arith.constant 0 : index
    %c0_42 = arith.constant 0 : index
    %c0_43 = arith.constant 0 : index
    %c0_44 = arith.constant 0 : index
    %42 = vector.load %arg6[%c0_40, %c0_41, %c0_42, %c0_43, %c0_44] : memref<1x4x2x16x16xf32, #tpu.memory_space<vmem>>, vector<1x4x1x16x8xf32>
    %43 = vector.shape_cast %42 : vector<1x4x1x16x8xf32> to vector<4x16x8xf32>
    %44 = vector.shape_cast %41 : vector<4x16x8xf32> to vector<1x4x1x16x8xf32>
    tpu.vector_store %arg6[%c0_40, %c0_41, %c0_42, %c0_43, %c0_44], %44 {strides = array<i32>} : memref<1x4x2x16x16xf32, #tpu.memory_space<vmem>>, vector<1x4x1x16x8xf32>,
    %45 = vector.extract_strided_slice %30 {offsets = [0, 2, 0], sizes = [4, 16, 8], strides = [1, 1, 1]} : vector<4x18x8xf32> to vector<4x16x8xf32>
    %cst_45 = arith.constant 2.500000e-01 : f32
    %46 = vector.broadcast %cst_45 : f32 to vector<4x16x8xf32>
    %47 = arith.mulf %46, %45 : vector<4x16x8xf32>
    %48 = arith.addf %37, %47 : vector<4x16x8xf32>
    %c0_46 = arith.constant 0 : index
    %c0_47 = arith.constant 0 : index
    %c0_48 = arith.constant 0 : index
    %c0_49 = arith.constant 0 : index
    %c8 = arith.constant 8 : index
    %49 = vector.load %arg6[%c0_46, %c0_47, %c0_48, %c0_49, %c8] : memref<1x4x2x16x16xf32, #tpu.memory_space<vmem>>, vector<1x4x1x16x8xf32>
    %50 = vector.shape_cast %49 : vector<1x4x1x16x8xf32> to vector<4x16x8xf32>
    %51 = vector.shape_cast %48 : vector<4x16x8xf32> to vector<1x4x1x16x8xf32>
    tpu.vector_store %arg6[%c0_46, %c0_47, %c0_48, %c0_49, %c8], %51 {strides = array<i32>} : memref<1x4x2x16x16xf32, #tpu.memory_space<vmem>>, vector<1x4x1x16x8xf32>,
    %52 = vector.extract_strided_slice %34 {offsets = [0, 1, 0], sizes = [4, 16, 8], strides = [1, 1, 1]} : vector<4x18x8xf32> to vector<4x16x8xf32>
    %cst_50 = arith.constant 7.500000e-01 : f32
    %53 = vector.broadcast %cst_50 : f32 to vector<4x16x8xf32>
    %54 = arith.mulf %53, %52 : vector<4x16x8xf32>
    %55 = vector.extract_strided_slice %34 {offsets = [0, 0, 0], sizes = [4, 16, 8], strides = [1, 1, 1]} : vector<4x18x8xf32> to vector<4x16x8xf32>
    %cst_51 = arith.constant 2.500000e-01 : f32
    %56 = vector.broadcast %cst_51 : f32 to vector<4x16x8xf32>
    %57 = arith.mulf %56, %55 : vector<4x16x8xf32>
    %58 = arith.addf %54, %57 : vector<4x16x8xf32>
    %c0_52 = arith.constant 0 : index
    %c0_53 = arith.constant 0 : index
    %c1_54 = arith.constant 1 : index
    %c0_55 = arith.constant 0 : index
    %c0_56 = arith.constant 0 : index
    %59 = vector.load %arg6[%c0_52, %c0_53, %c1_54, %c0_55, %c0_56] : memref<1x4x2x16x16xf32, #tpu.memory_space<vmem>>, vector<1x4x1x16x8xf32>
    %60 = vector.shape_cast %59 : vector<1x4x1x16x8xf32> to vector<4x16x8xf32>
    %61 = vector.shape_cast %58 : vector<4x16x8xf32> to vector<1x4x1x16x8xf32>
    tpu.vector_store %arg6[%c0_52, %c0_53, %c1_54, %c0_55, %c0_56], %61 {strides = array<i32>} : memref<1x4x2x16x16xf32, #tpu.memory_space<vmem>>, vector<1x4x1x16x8xf32>,
    %62 = vector.extract_strided_slice %34 {offsets = [0, 2, 0], sizes = [4, 16, 8], strides = [1, 1, 1]} : vector<4x18x8xf32> to vector<4x16x8xf32>
    %cst_57 = arith.constant 2.500000e-01 : f32
    %63 = vector.broadcast %cst_57 : f32 to vector<4x16x8xf32>
    %64 = arith.mulf %63, %62 : vector<4x16x8xf32>
    %65 = arith.addf %54, %64 : vector<4x16x8xf32>
    %c0_58 = arith.constant 0 : index
    %c0_59 = arith.constant 0 : index
    %c1_60 = arith.constant 1 : index
    %c0_61 = arith.constant 0 : index
    %c8_62 = arith.constant 8 : index
    %66 = vector.load %arg6[%c0_58, %c0_59, %c1_60, %c0_61, %c8_62] : memref<1x4x2x16x16xf32, #tpu.memory_space<vmem>>, vector<1x4x1x16x8xf32>
    %67 = vector.shape_cast %66 : vector<1x4x1x16x8xf32> to vector<4x16x8xf32>
    %68 = vector.shape_cast %65 : vector<4x16x8xf32> to vector<1x4x1x16x8xf32>
    tpu.vector_store %arg6[%c0_58, %c0_59, %c1_60, %c0_61, %c8_62], %68 {strides = array<i32>} : memref<1x4x2x16x16xf32, #tpu.memory_space<vmem>>, vector<1x4x1x16x8xf32>,
    return
  }
  func.func @transform_0(%arg0: i32, %arg1: i32) -> (i32, i32, i32, i32) {
    %c0_i32 = arith.constant 0 : i32
    %c0_i32_0 = arith.constant 0 : i32
    %c0_i32_1 = arith.constant 0 : i32
    return %arg0, %arg1, %c0_i32, %c0_i32_0 : i32, i32, i32, i32
  }
  func.func @transform_1(%arg0: i32, %arg1: i32) -> (i32, i32, i32, i32) {
    %c4_i32 = arith.constant 4 : i32
    %0 = arith.muli %arg1, %c4_i32 : i32
    %c1_i32 = arith.constant 1 : i32
    %1 = arith.subi %0, %c1_i32 : i32
    %c0_i32 = arith.constant 0 : i32
    %2 = arith.maxsi %1, %c0_i32 : i32
    %c0_i32_0 = arith.constant 0 : i32
    %c0_i32_1 = arith.constant 0 : i32
    %c0_i32_2 = arith.constant 0 : i32
    return %arg0, %2, %c0_i32_0, %c0_i32_1 : i32, i32, i32, i32
  }
  func.func @transform_2(%arg0: i32, %arg1: i32) -> (i32, i32, i32, i32) {
    %c4_i32 = arith.constant 4 : i32
    %0 = arith.muli %arg1, %c4_i32 : i32
    %c4_i32_0 = arith.constant 4 : i32
    %1 = arith.addi %0, %c4_i32_0 : i32
    %c15_i32 = arith.constant 15 : i32
    %2 = arith.minsi %1, %c15_i32 : i32
    %c0_i32 = arith.constant 0 : i32
    %c0_i32_1 = arith.constant 0 : i32
    %c0_i32_2 = arith.constant 0 : i32
    return %arg0, %2, %c0_i32, %c0_i32_1 : i32, i32, i32, i32
  }
  func.func @transform_3(%arg0: i32, %arg1: i32) -> (i32, i32) {
    %c0_i32 = arith.constant 0 : i32
    %c0_i32_0 = arith.constant 0 : i32
    %c0_i32_1 = arith.constant 0 : i32
    return %c0_i32, %c0_i32_0 : i32, i32
  }
  func.func @transform_4(%arg0: i32, %arg1: i32) -> (i32, i32, i32, i32, i32) {
    %c0_i32 = arith.constant 0 : i32
    %c0_i32_0 = arith.constant 0 : i32
    %c0_i32_1 = arith.constant 0 : i32
    %c0_i32_2 = arith.constant 0 : i32
    return %arg0, %arg1, %c0_i32, %c0_i32_0, %c0_i32_1 : i32, i32, i32, i32, i32
  }
}

</mosaic_0001>

<llo_original>
// kernel: tpu_custom_call.1
$region0: #{tpu_custom_call.1}
  #allocation0 [shape = 'u32[]', space=smem, size = 0x4, offset = 0x4, fixed_abs, tag = 'smem constant byte address 0x4 - core index']
  #allocation1 [shape = 'u32[144,128]{1,0:T(1,128)}', space=vmem, size = 0x12000, scoped, tag = 'internal scratch']
  #allocation2 [shape = 'f32[6,18,8]{2,1,0:T(8,128)}', space=vmem, size = 0x12000, scoped, tag = 'scratch operand']
  %s0 = inlined_call_operand.vmem [shape: f32[2,16,16,4], index: 0, kind: input, shape index: {}]
  %s1 = inlined_call_operand.vmem [shape: f32[2,16,16,4], index: 1, kind: input, shape index: {}]
  %s2 = inlined_call_operand.vmem [shape: f32[2,16,16,4], index: 2, kind: input, shape index: {}]
  %s3 = inlined_call_operand.vmem [shape: f32[4,8], index: 3, kind: input, shape index: {}]
  %s4 = inlined_call_operand.hbm [shape: f32[2,16,2,16,16], index: 4, kind: output, shape index: {}]
  %s5 = sld [smem:[#allocation0]]
  $region49: #{tpu_custom_call.1} parent=0
    _
  %s7 = ssub.s32 1, %s5
  %s8 = scalar_select 0, %s7, %s5
  $region1: #{tpu_custom_call.1} parent=0
    #allocation3 [shape = 'u8[131072]{0}', space=vmem, size = 0x20000, scoped, tag = 'output window, operand 0']
    #allocation4 [shape = 's32[2]{0}', space=sflag, size = 0x8, scoped, tag = 'scoped memory for tpu_custom_call.1']
    %9 = vsyncpa [#allocation4], 0
    %s10 = scalar_lea.sflag [#allocation4], 1
    %11 = vsyncpa %s10, 0
    loop: start=0, step=1, limit=10
    $region2: #{tpu_custom_call.1} parent=1 // loop_pre_header
      _
    $region3: #{tpu_custom_call.1} parent=1 // loop_header
      %s13 = sphi 0, %s17
      %p14 = scmp.ge.s32.totalorder %s13, 10
      %s20 = sphi 0, %s32
      %s21 = sphi 0, %s28
      %s22 = sphi 0, %s20
      %s23 = sphi 0, %s21
      %s24 = sphi 0, %s22
      %s25 = sphi 0, %s23
      %s37 = sphi 0, %s39
      %s40 = sphi 0, %s37
      %s41 = sphi 0, %s40
      %s57 = sphi 0, %s41
      %s73 = sphi 0, %s75
      %s76 = sphi 0, %s73
      %s77 = sphi 0, %s76
      %s93 = sphi 0, %s77
      %s109 = sphi 0, %s111
      %s112 = sphi 0, %s109
      %s113 = sphi 0, %s112
      %s129 = sphi 0, %s113
      %s133 = sphi 0, %s133
      %s135 = sphi 0, %s133
      %s136 = sphi 0, %s135
      %s150 = sphi 0, %s136
      %s158 = sphi 0, %s160
      %s161 = sphi 0, %s158
      %s162 = sphi 0, %s161
      %s178 = sphi 0, %s162
    $region4: #{tpu_custom_call.1} parent=1 // loop_header_branch
      %16 = sbr.rel (%p14) target = $region8
    $region5: #{tpu_custom_call.1} parent=1 // loop_body
      %s18 = ssub.s32 %s13, 1
      %s19 = ssub.s32 %s13, 2
      %s26 = sadd.s32 1, %s21
      %p27 = scmp.ge.s32.totalorder %s26, 4
      %s28 = scalar_select %p27, 0, %s26
      %s29 = sadd.s32 1, %s20
      %s30 = scalar_select %p27, %s29, %s20
      %p31 = scmp.ge.s32.totalorder %s30, 2
      %s32 = scalar_select %p31, 0, %s30
      %s33 = ssub.s32 %s20, %s32
      %s34 = ssub.s32 %s21, %s28
      %s35 = sor.u32 %s33, %s34
      %p36 = scmp.eq.s32.totalorder %s35, 0
      %s38 = sadd.s32 %s37, 1
      %s39 = scalar_select %p36, %s37, %s38
      %p42 = pneg %p36
      %p43 = scmp.eq.s32.totalorder %s13, 7
      %p44 = por %p42, %p43
      %p45 = scmp.ne.s32.totalorder %s37, %s40
      %p46 = scmp.eq.s32.totalorder %s13, 0
      %p47 = por %p45, %p46
      %p48 = scmp.ne.s32.totalorder %s37, %s40
      %p49 = scmp.eq.s32.totalorder %s18, 7
      %p50 = por %p48, %p49
      %p51 = scmp.ne.s32.totalorder %s40, %s41
      %p52 = scmp.eq.s32.totalorder %s18, 0
      %p53 = por %p51, %p52
      %p54 = scmp.ne.s32.totalorder %s40, %s41
      %p55 = scmp.eq.s32.totalorder %s19, 7
      %p56 = por %p54, %p55
      %p58 = scmp.ne.s32.totalorder %s41, %s57
      %p59 = scmp.eq.s32.totalorder %s19, 0
      %p60 = por %p58, %p59
      %s61 = smul.u32 %s21, 4
      %s62 = ssub.s32 %s61, 1
      %p63 = scmp.gt.s32.totalorder %s62, 0
      %s64 = scalar_select %p63, %s62, 0
      %s65 = smul.u32 %s28, 4
      %s66 = ssub.s32 %s65, 1
      %p67 = scmp.gt.s32.totalorder %s66, 0
      %s68 = scalar_select %p67, %s66, 0
      %s69 = ssub.s32 %s20, %s32
      %s70 = ssub.s32 %s64, %s68
      %s71 = sor.u32 %s69, %s70
      %p72 = scmp.eq.s32.totalorder %s71, 0
      %s74 = sadd.s32 %s73, 1
      %s75 = scalar_select %p72, %s73, %s74
      %p78 = pneg %p72
      %p79 = scmp.eq.s32.totalorder %s13, 7
      %p80 = por %p78, %p79
      %p81 = scmp.ne.s32.totalorder %s73, %s76
      %p82 = scmp.eq.s32.totalorder %s13, 0
      %p83 = por %p81, %p82
      %p84 = scmp.ne.s32.totalorder %s73, %s76
      %p85 = scmp.eq.s32.totalorder %s18, 7
      %p86 = por %p84, %p85
      %p87 = scmp.ne.s32.totalorder %s76, %s77
      %p88 = scmp.eq.s32.totalorder %s18, 0
      %p89 = por %p87, %p88
      %p90 = scmp.ne.s32.totalorder %s76, %s77
      %p91 = scmp.eq.s32.totalorder %s19, 7
      %p92 = por %p90, %p91
      %p94 = scmp.ne.s32.totalorder %s77, %s93
      %p95 = scmp.eq.s32.totalorder %s19, 0
      %p96 = por %p94, %p95
      %s97 = smul.u32 %s21, 4
      %s98 = sadd.s32 %s97, 4
      %p99 = scmp.lt.s32.totalorder %s98, 15
      %s100 = scalar_select %p99, %s98, 15
      %s101 = smul.u32 %s28, 4
      %s102 = sadd.s32 %s101, 4
      %p103 = scmp.lt.s32.totalorder %s102, 15
      %s104 = scalar_select %p103, %s102, 15
      %s105 = ssub.s32 %s20, %s32
      %s106 = ssub.s32 %s100, %s104
      %s107 = sor.u32 %s105, %s106
      %p108 = scmp.eq.s32.totalorder %s107, 0
      %s110 = sadd.s32 %s109, 1
      %s111 = scalar_select %p108, %s109, %s110
      %p114 = pneg %p108
      %p115 = scmp.eq.s32.totalorder %s13, 7
      %p116 = por %p114, %p115
      %p117 = scmp.ne.s32.totalorder %s109, %s112
      %p118 = scmp.eq.s32.totalorder %s13, 0
      %p119 = por %p117, %p118
      %p120 = scmp.ne.s32.totalorder %s109, %s112
      %p121 = scmp.eq.s32.totalorder %s18, 7
      %p122 = por %p120, %p121
      %p123 = scmp.ne.s32.totalorder %s112, %s113
      %p124 = scmp.eq.s32.totalorder %s18, 0
      %p125 = por %p123, %p124
      %p126 = scmp.ne.s32.totalorder %s112, %s113
      %p127 = scmp.eq.s32.totalorder %s19, 7
      %p128 = por %p126, %p127
      %p130 = scmp.ne.s32.totalorder %s113, %s129
      %p131 = scmp.eq.s32.totalorder %s19, 0
      %p132 = por %p130, %p131
      %s134 = sadd.s32 %s133, 1
      %p137 = scmp.eq.s32.totalorder %s13, 7
      %p138 = scmp.ne.s32.totalorder %s133, %s135
      %p139 = scmp.eq.s32.totalorder %s13, 0
      %p140 = por %p138, %p139
      %p141 = scmp.ne.s32.totalorder %s133, %s135
      %p142 = scmp.eq.s32.totalorder %s18, 7
      %p143 = por %p141, %p142
      %p144 = scmp.ne.s32.totalorder %s135, %s136
      %p145 = scmp.eq.s32.totalorder %s18, 0
      %p146 = por %p144, %p145
      %p147 = scmp.ne.s32.totalorder %s135, %s136
      %p148 = scmp.eq.s32.totalorder %s19, 7
      %p149 = por %p147, %p148
      %p151 = scmp.ne.s32.totalorder %s136, %s150
      %p152 = scmp.eq.s32.totalorder %s19, 0
      %p153 = por %p151, %p152
      %s154 = ssub.s32 %s20, %s32
      %s155 = ssub.s32 %s21, %s28
      %s156 = sor.u32 %s154, %s155
      %p157 = scmp.eq.s32.totalorder %s156, 0
      %s159 = sadd.s32 %s158, 1
      %s160 = scalar_select %p157, %s158, %s159
      %p163 = pneg %p157
      %p164 = scmp.eq.s32.totalorder %s13, 7
      %p165 = por %p163, %p164
      %p166 = scmp.ne.s32.totalorder %s158, %s161
      %p167 = scmp.eq.s32.totalorder %s13, 0
      %p168 = por %p166, %p167
      %p169 = scmp.ne.s32.totalorder %s158, %s161
      %p170 = scmp.eq.s32.totalorder %s18, 7
      %p171 = por %p169, %p170
      %p172 = scmp.ne.s32.totalorder %s161, %s162
      %p173 = scmp.eq.s32.totalorder %s18, 0
      %p174 = por %p172, %p173
      %p175 = scmp.ne.s32.totalorder %s161, %s162
      %p176 = scmp.eq.s32.totalorder %s19, 7
      %p177 = por %p175, %p176
      %p179 = scmp.ne.s32.totalorder %s162, %s178
      %p180 = scmp.eq.s32.totalorder %s19, 0
      %p181 = por %p179, %p180
      %p182 = scmp.le.s32.totalorder 1, %s13
      %p183 = scmp.lt.s32.totalorder %s13, 9
      %p184 = pnand %p182, %p183
      %p185 = pneg %p184
      // Predicated region
      $region9: #{tpu_custom_call.1} parent=5 // pred_check
        _
      $region10: #{tpu_custom_call.1} parent=5 // pred_check_branch
        %187 = sbr.rel (%p184) target = $region12
      $region11: #{tpu_custom_call.1} parent=5 // pred_region
        %s188 = ssub.s32 %s13, 1
        // Predicated region
        $region13: #{tpu_custom_call.1} parent=11 // pred_check
          %p189 = pneg %p146
        $region14: #{tpu_custom_call.1} parent=11 // pred_check_branch
          %191 = sbr.rel (%p189) target = $region16
        $region15: #{tpu_custom_call.1} parent=11 // pred_region
          _
        $region16: #{tpu_custom_call.1} parent=11 // pred_fallthru
          _
      $region12: #{tpu_custom_call.1} parent=5 // pred_fallthru
        _
      %p192 = scmp.lt.s32.totalorder %s13, 8
      // Predicated region
      $region17: #{tpu_custom_call.1} parent=5 // pred_check
        %p193 = pneg %p192
      $region18: #{tpu_custom_call.1} parent=5 // pred_check_branch
        %195 = sbr.rel (%p193) target = $region20
      $region19: #{tpu_custom_call.1} parent=5 // pred_region
        // Predicated region
        $region21: #{tpu_custom_call.1} parent=19 // pred_check
          %p196 = pneg %p47
        $region22: #{tpu_custom_call.1} parent=19 // pred_check_branch
          %198 = sbr.rel (%p196) target = $region24
        $region23: #{tpu_custom_call.1} parent=19 // pred_region
          %s199 = smul.u32 4, %s21
          %p200 = scmp.lt.s32.totalorder %s20, 1
          %s201 = scalar_select %p200, %s20, 1
          %p202 = scmp.lt.s32.totalorder %s199, 15
          %s203 = scalar_select %p202, %s199, 15
          %s204 = smul.addr %s203, 2
          %s205 = smul.addr %s201, 32
          %s206 = sadd.s32 %s204, %s205
          %s207 = smul.addr %s206, 8
          %s208 = scalar_lea.vmem %s0, %s207
          %s209 = smul.u32 4, %s21
        $region24: #{tpu_custom_call.1} parent=19 // pred_fallthru
          _
        // Predicated region
        $region25: #{tpu_custom_call.1} parent=19 // pred_check
          %p210 = pneg %p83
        $region26: #{tpu_custom_call.1} parent=19 // pred_check_branch
          %212 = sbr.rel (%p210) target = $region28
        $region27: #{tpu_custom_call.1} parent=19 // pred_region
          %s213 = smul.u32 %s21, 4
          %s214 = ssub.s32 %s213, 1
          %p215 = scmp.gt.s32.totalorder %s214, 0
          %s216 = scalar_select %p215, %s214, 0
          %p217 = scmp.lt.s32.totalorder %s20, 1
          %s218 = scalar_select %p217, %s20, 1
          %p219 = scmp.lt.s32.totalorder %s216, 15
          %s220 = scalar_select %p219, %s216, 15
          %s221 = smul.addr %s220, 2
          %s222 = smul.addr %s218, 32
          %s223 = sadd.s32 %s221, %s222
          %s224 = smul.addr %s223, 8
          %s225 = scalar_lea.vmem %s1, %s224
          %s226 = smul.u32 %s21, 4
          %s227 = ssub.s32 %s226, 1
          %p228 = scmp.gt.s32.totalorder %s227, 0
          %s229 = scalar_select %p228, %s227, 0
        $region28: #{tpu_custom_call.1} parent=19 // pred_fallthru
          _
        // Predicated region
        $region29: #{tpu_custom_call.1} parent=19 // pred_check
          %p230 = pneg %p119
        $region30: #{tpu_custom_call.1} parent=19 // pred_check_branch
          %232 = sbr.rel (%p230) target = $region32
        $region31: #{tpu_custom_call.1} parent=19 // pred_region
          %s233 = smul.u32 %s21, 4
          %s234 = sadd.s32 %s233, 4
          %p235 = scmp.lt.s32.totalorder %s234, 15
          %s236 = scalar_select %p235, %s234, 15
          %p237 = scmp.lt.s32.totalorder %s20, 1
          %s238 = scalar_select %p237, %s20, 1
          %p239 = scmp.lt.s32.totalorder %s236, 15
          %s240 = scalar_select %p239, %s236, 15
          %s241 = smul.addr %s240, 2
          %s242 = smul.addr %s238, 32
          %s243 = sadd.s32 %s241, %s242
          %s244 = smul.addr %s243, 8
          %s245 = scalar_lea.vmem %s2, %s244
          %s246 = smul.u32 %s21, 4
          %s247 = sadd.s32 %s246, 4
          %p248 = scmp.lt.s32.totalorder %s247, 15
          %s249 = scalar_select %p248, %s247, 15
        $region32: #{tpu_custom_call.1} parent=19 // pred_fallthru
          _
      $region20: #{tpu_custom_call.1} parent=5 // pred_fallthru
        _
      %p250 = scmp.le.s32.totalorder 1, %s13
      %p251 = scmp.lt.s32.totalorder %s13, 9
      %p252 = pnand %p250, %p251
      %p253 = pneg %p252
      // Predicated region
      $region33: #{tpu_custom_call.1} parent=5 // pred_check
        _
      $region34: #{tpu_custom_call.1} parent=5 // pred_check_branch
        %255 = sbr.rel (%p252) target = $region36
      $region35: #{tpu_custom_call.1} parent=5 // pred_region
        %s256 = ssub.s32 %s13, 1
        %s257 = smul.u32 4, %s23
        %p258 = scmp.lt.s32.totalorder %s22, 1
        %s259 = scalar_select %p258, %s22, 1
        %p260 = scmp.lt.s32.totalorder %s257, 15
        %s261 = scalar_select %p260, %s257, 15
        %s262 = smul.addr %s261, 2
        %s263 = smul.addr %s259, 32
        %s264 = sadd.s32 %s262, %s263
        %s265 = smul.addr %s264, 8
        %s266 = scalar_lea.vmem %s0, %s265
        %p267 = pneg %p53
        %p268 = pneg %p50
        %s269 = smul.u32 %s23, 4
        %s270 = ssub.s32 %s269, 1
        %p271 = scmp.gt.s32.totalorder %s270, 0
        %s272 = scalar_select %p271, %s270, 0
        %p273 = scmp.lt.s32.totalorder %s22, 1
        %s274 = scalar_select %p273, %s22, 1
        %p275 = scmp.lt.s32.totalorder %s272, 15
        %s276 = scalar_select %p275, %s272, 15
        %s277 = smul.addr %s276, 2
        %s278 = smul.addr %s274, 32
        %s279 = sadd.s32 %s277, %s278
        %s280 = smul.addr %s279, 8
        %s281 = scalar_lea.vmem %s1, %s280
        %p282 = pneg %p89
        %p283 = pneg %p86
        %s284 = smul.u32 %s23, 4
        %s285 = sadd.s32 %s284, 4
        %p286 = scmp.lt.s32.totalorder %s285, 15
        %s287 = scalar_select %p286, %s285, 15
        %p288 = scmp.lt.s32.totalorder %s22, 1
        %s289 = scalar_select %p288, %s22, 1
        %p290 = scmp.lt.s32.totalorder %s287, 15
        %s291 = scalar_select %p290, %s287, 15
        %s292 = smul.addr %s291, 2
        %s293 = smul.addr %s289, 32
        %s294 = sadd.s32 %s292, %s293
        %s295 = smul.addr %s294, 8
        %s296 = scalar_lea.vmem %s2, %s295
        %p297 = pneg %p125
        %p298 = pneg %p122
        %p299 = pneg %p146
        %p300 = pneg %p143
        %p301 = pneg %p174
        %p302 = pneg %p171
        %s303 = sand.u32 %s161, 1
        %s304 = scalar_lea.sflag [#allocation4], %s303
        %s305 = sand.u32 %s161, 1
        %s306 = smul.addr %s305, 128
        %s307 = scalar_lea.vmem [#allocation3], %s306
        %s308 = smul.u32 4, %s23
        %p309 = scmp.lt.s32.totalorder %s22, 1
        %s310 = scalar_select %p309, %s22, 1
        %p311 = scmp.lt.s32.totalorder %s308, 15
        %s312 = scalar_select %p311, %s308, 15
        %s313 = smul.addr %s312, 2
        %s314 = smul.addr %s310, 32
        %s315 = sadd.s32 %s313, %s314
        %s316 = smul.addr %s315, 8
        %s317 = scalar_lea.vmem %s0, %s316
        %s318 = smul.u32 4, %s23
        %s319 = smul.u32 %s23, 4
        %s320 = ssub.s32 %s319, 1
        %p321 = scmp.gt.s32.totalorder %s320, 0
        %s322 = scalar_select %p321, %s320, 0
        %p323 = scmp.lt.s32.totalorder %s22, 1
        %s324 = scalar_select %p323, %s22, 1
        %p325 = scmp.lt.s32.totalorder %s322, 15
        %s326 = scalar_select %p325, %s322, 15
        %s327 = smul.addr %s326, 2
        %s328 = smul.addr %s324, 32
        %s329 = sadd.s32 %s327, %s328
        %s330 = smul.addr %s329, 8
        %s331 = scalar_lea.vmem %s1, %s330
        %s332 = smul.u32 %s23, 4
        %s333 = ssub.s32 %s332, 1
        %p334 = scmp.gt.s32.totalorder %s333, 0
        %s335 = scalar_select %p334, %s333, 0
        %s336 = smul.u32 %s23, 4
        %s337 = sadd.s32 %s336, 4
        %p338 = scmp.lt.s32.totalorder %s337, 15
        %s339 = scalar_select %p338, %s337, 15
        %p340 = scmp.lt.s32.totalorder %s22, 1
        %s341 = scalar_select %p340, %s22, 1
        %p342 = scmp.lt.s32.totalorder %s339, 15
        %s343 = scalar_select %p342, %s339, 15
        %s344 = smul.addr %s343, 2
        %s345 = smul.addr %s341, 32
        %s346 = sadd.s32 %s344, %s345
        %s347 = smul.addr %s346, 8
        %s348 = scalar_lea.vmem %s2, %s347
        %s349 = smul.u32 %s23, 4
        %s350 = sadd.s32 %s349, 4
        %p351 = scmp.lt.s32.totalorder %s350, 15
        %s352 = scalar_select %p351, %s350, 15
        %s353 = smul.u32 4, %s23
        %v354 = vld [vmem:[%s3] sm:$0xf]
        %v355 = vld [vmem:[%s317] sm:$0xff]
        %v356 = vld [vmem:[%s317 + $0x8] sm:$0xff]
        %v357 = vld [vmem:[%s317 + $0x10] sm:$0xff]
        %v358 = vld [vmem:[%s317 + $0x18] sm:$0xff]
        %v359 = vld [vmem:[%s317 + $0x20] sm:$0xff]
        %v360 = vld [vmem:[%s317 + $0x28] sm:$0xff]
        %v361 = vld [vmem:[%s317 + $0x30] sm:$0xff]
        %v362 = vld [vmem:[%s317 + $0x38] sm:$0xff]
        %vm363 = vcmask 31744
        %v365 = vsel %vm363, %v355, 0
        %v368 = vsel %vm363, %v356, 0
        %v371 = vsel %vm363, %v357, 0
        %v374 = vsel %vm363, %v358, 0
        %v377 = vsel %vm363, %v359, 0
        %v380 = vsel %vm363, %v360, 0
        %v383 = vsel %vm363, %v361, 0
        %v386 = vsel %vm363, %v362, 0
        %vm388 = vcmask 1043456
        %v390 = vsel %vm388, %v354, 0
        %392 = vmatprep.subr.mxu0 0.0
        %393 = vmatpush1.msra.mxu0 %v390
        %394 = vmatprep.subr.mxu0 0.0
        %395 = vmatpush1.msra.mxu0 0.0
        %396 = vmatprep.subr.mxu0 0.0
        %397 = vmatpush1.msra.mxu0 0.0
        %398 = vmatprep.subr.mxu0 0.0
        %399 = vmatpush1.msra.mxu0 0.0
        %400 = vmatprep.subr.mxu0 0.0
        %401 = vmatpush1.msra.mxu0 0.0
        %402 = vmatprep.subr.mxu0 0.0
        %403 = vmatpush1.msra.mxu0 0.0
        %404 = vmatprep.subr.mxu0 0.0
        %405 = vmatpush1.msra.mxu0 0.0
        %406 = vmatprep.subr.mxu0 0.0
        %407 = vmatpush1.msra.mxu0 0.0
        %408 = vmatprep.subr.mxu0 0.0
        %409 = vmatpush1.msra.mxu0 0.0
        %410 = vmatprep.subr.mxu0 0.0
        %411 = vmatpush1.msra.mxu0 0.0
        %412 = vmatprep.subr.mxu0 0.0
        %413 = vmatpush1.msra.mxu0 0.0
        %414 = vmatprep.subr.mxu0 0.0
        %415 = vmatpush1.msra.mxu0 0.0
        %416 = vmatprep.subr.mxu0 0.0
        %417 = vmatpush1.msra.mxu0 0.0
        %418 = vmatprep.subr.mxu0 0.0
        %419 = vmatpush1.msra.mxu0 0.0
        %420 = vmatprep.subr.mxu0 0.0
        %421 = vmatpush1.msra.mxu0 0.0
        %422 = vmatprep.subr.mxu0 0.0
        %423 = vmatpush1.msra.mxu0 0.0
        %424 = vmatprep.subr.mxu0 0.0
        %425 = vmatpush1.msra.mxu0 0.0
        %426 = vmatprep.subr.mxu0 0.0
        %427 = vmatpush1.msra.mxu0 0.0
        %428 = vmatprep.subr.mxu0 0.0
        %429 = vmatpush1.msra.mxu0 0.0
        %430 = vmatprep.subr.mxu0 0.0
        %431 = vmatpush1.msra.mxu0 0.0
        %432 = vmatprep.subr.mxu0 0.0
        %433 = vmatpush1.msra.mxu0 0.0
        %434 = vmatprep.subr.mxu0 0.0
        %435 = vmatpush1.msra.mxu0 0.0
        %436 = vmatprep.subr.mxu0 0.0
        %437 = vmatpush1.msra.mxu0 0.0
        %438 = vmatprep.subr.mxu0 0.0
        %439 = vmatpush1.msra.mxu0 0.0
        %440 = vmatprep.subr.mxu0 0.0
        %441 = vmatpush1.msra.mxu0 0.0
        %442 = vmatprep.subr.mxu0 0.0
        %443 = vmatpush1.msra.mxu0 0.0
        %444 = vmatprep.subr.mxu0 0.0
        %445 = vmatpush1.msra.mxu0 0.0
        %446 = vmatprep.subr.mxu0 0.0
        %447 = vmatpush1.msra.mxu0 0.0
        %448 = vmatprep.subr.mxu0 0.0
        %449 = vmatpush1.msra.mxu0 0.0
        %450 = vmatprep.subr.mxu0 0.0
        %451 = vmatpush1.msra.mxu0 0.0
        %452 = vmatprep.subr.mxu0 0.0
        %453 = vmatpush1.msra.mxu0 0.0
        %454 = vmatprep.subr.mxu0 0.0
        %455 = vmatpush1.msra.mxu0 0.0
        %456 = vmatprep.mubr.f32.mxu0 0.0
        %457 = vmatmul.mubr.f32.gmra.mrb[0].mxu0 %v365
        %v458 = vpop.f32.mrb[0].mxu0
        %v459 = vadd.f32 0.0, %v458
        %v460 = vpop.f32.mrb[0].mxu0
        %461 = vmatprep.mubr.f32.mxu0 0.0
        %462 = vmatmul.mubr.f32.gmra.mrb[0].mxu0 %v368
        %v463 = vpop.f32.mrb[0].mxu0
        %v464 = vadd.f32 0.0, %v463
        %v465 = vpop.f32.mrb[0].mxu0
        %466 = vmatprep.mubr.f32.mxu0 0.0
        %467 = vmatmul.mubr.f32.gmra.mrb[0].mxu0 %v371
        %v468 = vpop.f32.mrb[0].mxu0
        %v469 = vadd.f32 0.0, %v468
        %v470 = vpop.f32.mrb[0].mxu0
        %471 = vmatprep.mubr.f32.mxu0 0.0
        %472 = vmatmul.mubr.f32.gmra.mrb[0].mxu0 %v374
        %v473 = vpop.f32.mrb[0].mxu0
        %v474 = vadd.f32 0.0, %v473
        %v475 = vpop.f32.mrb[0].mxu0
        %476 = vmatprep.mubr.f32.mxu0 0.0
        %477 = vmatmul.mubr.f32.gmra.mrb[0].mxu0 %v377
        %v478 = vpop.f32.mrb[0].mxu0
        %v479 = vadd.f32 0.0, %v478
        %v480 = vpop.f32.mrb[0].mxu0
        %481 = vmatprep.mubr.f32.mxu0 0.0
        %482 = vmatmul.mubr.f32.gmra.mrb[0].mxu0 %v380
        %v483 = vpop.f32.mrb[0].mxu0
        %v484 = vadd.f32 0.0, %v483
        %v485 = vpop.f32.mrb[0].mxu0
        %486 = vmatprep.mubr.f32.mxu0 0.0
        %487 = vmatmul.mubr.f32.gmra.mrb[0].mxu0 %v383
        %v488 = vpop.f32.mrb[0].mxu0
        %v489 = vadd.f32 0.0, %v488
        %v490 = vpop.f32.mrb[0].mxu0
        %491 = vmatprep.mubr.f32.mxu0 0.0
        %492 = vmatmul.mubr.f32.gmra.mrb[0].mxu0 %v386
        %v493 = vpop.f32.mrb[0].mxu0
        %v494 = vadd.f32 0.0, %v493
        %v495 = vpop.f32.mrb[0].mxu0
        %496 = vdwg.mxu0
        %s497 = scalar_lea.vmem [#allocation2], 24
        %vm498 = vcmask 64512
        %499 = vst.msk [vmem:[%s497 + $0x1] sm:$0xff] %vm498, %v459
        %500 = vst.msk [vmem:[%s497 + $0x9] sm:$0xff] %vm498, %v464
        %501 = vst.msk [vmem:[%s497 + $0x19] sm:$0xff] %vm498, %v469
        %502 = vst.msk [vmem:[%s497 + $0x21] sm:$0xff] %vm498, %v474
        %503 = vst.msk [vmem:[%s497 + $0x31] sm:$0xff] %vm498, %v479
        %504 = vst.msk [vmem:[%s497 + $0x39] sm:$0xff] %vm498, %v484
        %505 = vst.msk [vmem:[%s497 + $0x49] sm:$0xff] %vm498, %v489
        %506 = vst.msk [vmem:[%s497 + $0x51] sm:$0xff] %vm498, %v494
        %v507 = vld [vmem:[%s331] sm:$0xff]
        %v508 = vld [vmem:[%s331 + $0x8] sm:$0xff]
        %v510 = vsel %vm363, %v507, 0
        %v513 = vsel %vm363, %v508, 0
        %515 = vmatprep.subr.mxu0 0.0
        %516 = vmatpush1.msra.mxu0 %v390
        %517 = vmatprep.subr.mxu0 0.0
        %518 = vmatpush1.msra.mxu0 0.0
        %519 = vmatprep.subr.mxu0 0.0
        %520 = vmatpush1.msra.mxu0 0.0
        %521 = vmatprep.subr.mxu0 0.0
        %522 = vmatpush1.msra.mxu0 0.0
        %523 = vmatprep.subr.mxu0 0.0
        %524 = vmatpush1.msra.mxu0 0.0
        %525 = vmatprep.subr.mxu0 0.0
        %526 = vmatpush1.msra.mxu0 0.0
        %527 = vmatprep.subr.mxu0 0.0
        %528 = vmatpush1.msra.mxu0 0.0
        %529 = vmatprep.subr.mxu0 0.0
        %530 = vmatpush1.msra.mxu0 0.0
        %531 = vmatprep.subr.mxu0 0.0
        %532 = vmatpush1.msra.mxu0 0.0
        %533 = vmatprep.subr.mxu0 0.0
        %534 = vmatpush1.msra.mxu0 0.0
        %535 = vmatprep.subr.mxu0 0.0
        %536 = vmatpush1.msra.mxu0 0.0
        %537 = vmatprep.subr.mxu0 0.0
        %538 = vmatpush1.msra.mxu0 0.0
        %539 = vmatprep.subr.mxu0 0.0
        %540 = vmatpush1.msra.mxu0 0.0
        %541 = vmatprep.subr.mxu0 0.0
        %542 = vmatpush1.msra.mxu0 0.0
        %543 = vmatprep.subr.mxu0 0.0
        %544 = vmatpush1.msra.mxu0 0.0
        %545 = vmatprep.subr.mxu0 0.0
        %546 = vmatpush1.msra.mxu0 0.0
        %547 = vmatprep.subr.mxu0 0.0
        %548 = vmatpush1.msra.mxu0 0.0
        %549 = vmatprep.subr.mxu0 0.0
        %550 = vmatpush1.msra.mxu0 0.0
        %551 = vmatprep.subr.mxu0 0.0
        %552 = vmatpush1.msra.mxu0 0.0
        %553 = vmatprep.subr.mxu0 0.0
        %554 = vmatpush1.msra.mxu0 0.0
        %555 = vmatprep.subr.mxu0 0.0
        %556 = vmatpush1.msra.mxu0 0.0
        %557 = vmatprep.subr.mxu0 0.0
        %558 = vmatpush1.msra.mxu0 0.0
        %559 = vmatprep.subr.mxu0 0.0
        %560 = vmatpush1.msra.mxu0 0.0
        %561 = vmatprep.subr.mxu0 0.0
        %562 = vmatpush1.msra.mxu0 0.0
        %563 = vmatprep.subr.mxu0 0.0
        %564 = vmatpush1.msra.mxu0 0.0
        %565 = vmatprep.subr.mxu0 0.0
        %566 = vmatpush1.msra.mxu0 0.0
        %567 = vmatprep.subr.mxu0 0.0
        %568 = vmatpush1.msra.mxu0 0.0
        %569 = vmatprep.subr.mxu0 0.0
        %570 = vmatpush1.msra.mxu0 0.0
        %571 = vmatprep.subr.mxu0 0.0
        %572 = vmatpush1.msra.mxu0 0.0
        %573 = vmatprep.subr.mxu0 0.0
        %574 = vmatpush1.msra.mxu0 0.0
        %575 = vmatprep.subr.mxu0 0.0
        %576 = vmatpush1.msra.mxu0 0.0
        %577 = vmatprep.subr.mxu0 0.0
        %578 = vmatpush1.msra.mxu0 0.0
        %579 = vmatprep.mubr.f32.mxu0 0.0
        %580 = vmatmul.mubr.f32.gmra.mrb[0].mxu0 %v510
        %v581 = vpop.f32.mrb[0].mxu0
        %v582 = vadd.f32 0.0, %v581
        %v583 = vpop.f32.mrb[0].mxu0
        %584 = vmatprep.mubr.f32.mxu0 0.0
        %585 = vmatmul.mubr.f32.gmra.mrb[0].mxu0 %v513
        %v586 = vpop.f32.mrb[0].mxu0
        %v587 = vadd.f32 0.0, %v586
        %v588 = vpop.f32.mrb[0].mxu0
        %589 = vdwg.mxu0
        %590 = vst.msk [vmem:[#allocation2 + $0x1] sm:$0xff] %vm498, %v582
        %591 = vst.msk [vmem:[#allocation2 + $0x9] sm:$0xff] %vm498, %v587
        %v592 = vld [vmem:[%s348] sm:$0xff]
        %v593 = vld [vmem:[%s348 + $0x8] sm:$0xff]
        %v595 = vsel %vm363, %v592, 0
        %v598 = vsel %vm363, %v593, 0
        %600 = vmatprep.subr.mxu0 0.0
        %601 = vmatpush1.msra.mxu0 %v390
        %602 = vmatprep.subr.mxu0 0.0
        %603 = vmatpush1.msra.mxu0 0.0
        %604 = vmatprep.subr.mxu0 0.0
        %605 = vmatpush1.msra.mxu0 0.0
        %606 = vmatprep.subr.mxu0 0.0
        %607 = vmatpush1.msra.mxu0 0.0
        %608 = vmatprep.subr.mxu0 0.0
        %609 = vmatpush1.msra.mxu0 0.0
        %610 = vmatprep.subr.mxu0 0.0
        %611 = vmatpush1.msra.mxu0 0.0
        %612 = vmatprep.subr.mxu0 0.0
        %613 = vmatpush1.msra.mxu0 0.0
        %614 = vmatprep.subr.mxu0 0.0
        %615 = vmatpush1.msra.mxu0 0.0
        %616 = vmatprep.subr.mxu0 0.0
        %617 = vmatpush1.msra.mxu0 0.0
        %618 = vmatprep.subr.mxu0 0.0
        %619 = vmatpush1.msra.mxu0 0.0
        %620 = vmatprep.subr.mxu0 0.0
        %621 = vmatpush1.msra.mxu0 0.0
        %622 = vmatprep.subr.mxu0 0.0
        %623 = vmatpush1.msra.mxu0 0.0
        %624 = vmatprep.subr.mxu0 0.0
        %625 = vmatpush1.msra.mxu0 0.0
        %626 = vmatprep.subr.mxu0 0.0
        %627 = vmatpush1.msra.mxu0 0.0
        %628 = vmatprep.subr.mxu0 0.0
        %629 = vmatpush1.msra.mxu0 0.0
        %630 = vmatprep.subr.mxu0 0.0
        %631 = vmatpush1.msra.mxu0 0.0
        %632 = vmatprep.subr.mxu0 0.0
        %633 = vmatpush1.msra.mxu0 0.0
        %634 = vmatprep.subr.mxu0 0.0
        %635 = vmatpush1.msra.mxu0 0.0
        %636 = vmatprep.subr.mxu0 0.0
        %637 = vmatpush1.msra.mxu0 0.0
        %638 = vmatprep.subr.mxu0 0.0
        %639 = vmatpush1.msra.mxu0 0.0
        %640 = vmatprep.subr.mxu0 0.0
        %641 = vmatpush1.msra.mxu0 0.0
        %642 = vmatprep.subr.mxu0 0.0
        %643 = vmatpush1.msra.mxu0 0.0
        %644 = vmatprep.subr.mxu0 0.0
        %645 = vmatpush1.msra.mxu0 0.0
        %646 = vmatprep.subr.mxu0 0.0
        %647 = vmatpush1.msra.mxu0 0.0
        %648 = vmatprep.subr.mxu0 0.0
        %649 = vmatpush1.msra.mxu0 0.0
        %650 = vmatprep.subr.mxu0 0.0
        %651 = vmatpush1.msra.mxu0 0.0
        %652 = vmatprep.subr.mxu0 0.0
        %653 = vmatpush1.msra.mxu0 0.0
        %654 = vmatprep.subr.mxu0 0.0
        %655 = vmatpush1.msra.mxu0 0.0
        %656 = vmatprep.subr.mxu0 0.0
        %657 = vmatpush1.msra.mxu0 0.0
        %658 = vmatprep.subr.mxu0 0.0
        %659 = vmatpush1.msra.mxu0 0.0
        %660 = vmatprep.subr.mxu0 0.0
        %661 = vmatpush1.msra.mxu0 0.0
        %662 = vmatprep.subr.mxu0 0.0
        %663 = vmatpush1.msra.mxu0 0.0
        %664 = vmatprep.mubr.f32.mxu0 0.0
        %665 = vmatmul.mubr.f32.gmra.mrb[0].mxu0 %v595
        %v666 = vpop.f32.mrb[0].mxu0
        %v667 = vadd.f32 0.0, %v666
        %v668 = vpop.f32.mrb[0].mxu0
        %669 = vmatprep.mubr.f32.mxu0 0.0
        %670 = vmatmul.mubr.f32.gmra.mrb[0].mxu0 %v598
        %v671 = vpop.f32.mrb[0].mxu0
        %v672 = vadd.f32 0.0, %v671
        %v673 = vpop.f32.mrb[0].mxu0
        %674 = vdwg.mxu0
        %s675 = scalar_lea.vmem [#allocation2], 120
        %676 = vst.msk [vmem:[%s675 + $0x1] sm:$0xff] %vm498, %v667
        %677 = vst.msk [vmem:[%s675 + $0x9] sm:$0xff] %vm498, %v672
        %v678 = vld [vmem:[#allocation2 + $0x1] sm:$0x1]
        %v679 = vld [vmem:[#allocation2 + $0x19] sm:$0x1]
        %v680 = vld [vmem:[#allocation2 + $0x31] sm:$0x1]
        %v681 = vld [vmem:[#allocation2 + $0x49] sm:$0x1]
        %v682 = vld [vmem:[#allocation2 + $0x61] sm:$0x1]
        %v683 = vld [vmem:[#allocation2 + $0x79] sm:$0x1]
        %vm684 = vcmask 57344
        %685 = vst.msk [vmem:[#allocation2] sm:$0x1] %vm684, %v678
        %686 = vst.msk [vmem:[#allocation2 + $0x18] sm:$0x1] %vm684, %v679
        %687 = vst.msk [vmem:[#allocation2 + $0x30] sm:$0x1] %vm684, %v680
        %688 = vst.msk [vmem:[#allocation2 + $0x48] sm:$0x1] %vm684, %v681
        %689 = vst.msk [vmem:[#allocation2 + $0x60] sm:$0x1] %vm684, %v682
        %690 = vst.msk [vmem:[#allocation2 + $0x78] sm:$0x1] %vm684, %v683
        %v691 = vld [vmem:[#allocation2 + $0x10] sm:$0x1]
        %v692 = vld [vmem:[#allocation2 + $0x28] sm:$0x1]
        %v693 = vld [vmem:[#allocation2 + $0x40] sm:$0x1]
        %v694 = vld [vmem:[#allocation2 + $0x58] sm:$0x1]
        %v695 = vld [vmem:[#allocation2 + $0x70] sm:$0x1]
        %v696 = vld [vmem:[#allocation2 + $0x88] sm:$0x1]
        %697 = vst.msk [vmem:[#allocation2 + $0x11] sm:$0x1] %vm684, %v691
        %698 = vst.msk [vmem:[#allocation2 + $0x29] sm:$0x1] %vm684, %v692
        %699 = vst.msk [vmem:[#allocation2 + $0x41] sm:$0x1] %vm684, %v693
        %700 = vst.msk [vmem:[#allocation2 + $0x59] sm:$0x1] %vm684, %v694
        %701 = vst.msk [vmem:[#allocation2 + $0x71] sm:$0x1] %vm684, %v695
        %702 = vst.msk [vmem:[#allocation2 + $0x89] sm:$0x1] %vm684, %v696
        %v703 = vld [vmem:[#allocation2] sm:$0xff]
        %v704 = vld [vmem:[#allocation2 + $0x8] sm:$0xff]
        %v705 = vld [vmem:[#allocation2 + $0x10] sm:$0x3]
        %v706 = vld [vmem:[#allocation2 + $0x18] sm:$0xff]
        %v707 = vld [vmem:[#allocation2 + $0x20] sm:$0xff]
        %v708 = vld [vmem:[#allocation2 + $0x28] sm:$0x3]
        %v709 = vld [vmem:[#allocation2 + $0x30] sm:$0xff]
        %v710 = vld [vmem:[#allocation2 + $0x38] sm:$0xff]
        %v711 = vld [vmem:[#allocation2 + $0x40] sm:$0x3]
        %v712 = vld [vmem:[#allocation2 + $0x48] sm:$0xff]
        %v713 = vld [vmem:[#allocation2 + $0x50] sm:$0xff]
        %v714 = vld [vmem:[#allocation2 + $0x58] sm:$0x3]
        %v715 = vld [vmem:[#allocation2 + $0x60] sm:$0xff]
        %v716 = vld [vmem:[#allocation2 + $0x68] sm:$0xff]
        %v717 = vld [vmem:[#allocation2 + $0x70] sm:$0x3]
        %v718 = vld [vmem:[#allocation2 + $0x78] sm:$0xff]
        %v719 = vld [vmem:[#allocation2 + $0x80] sm:$0xff]
        %v720 = vld [vmem:[#allocation2 + $0x88] sm:$0x3]
        %v721 = vmul.f32 %v706, 0.75
        %v722 = vmul.f32 %v707, 0.75
        %v723 = vmul.f32 %v708, 0.75
        %v724 = vmul.f32 %v709, 0.75
        %v725 = vmul.f32 %v710, 0.75
        %v726 = vmul.f32 %v711, 0.75
        %v727 = vmul.f32 %v712, 0.75
        %v728 = vmul.f32 %v713, 0.75
        %v729 = vmul.f32 %v714, 0.75
        %v730 = vmul.f32 %v715, 0.75
        %v731 = vmul.f32 %v716, 0.75
        %v732 = vmul.f32 %v717, 0.75
        %v733 = vmul.f32 %v703, 0.25
        %v734 = vmul.f32 %v704, 0.25
        %v735 = vmul.f32 %v705, 0.25
        %v736 = vmul.f32 %v706, 0.25
        %v737 = vmul.f32 %v707, 0.25
        %v738 = vmul.f32 %v708, 0.25
        %v739 = vmul.f32 %v709, 0.25
        %v740 = vmul.f32 %v710, 0.25
        %v741 = vmul.f32 %v711, 0.25
        %v742 = vmul.f32 %v712, 0.25
        %v743 = vmul.f32 %v713, 0.25
        %v744 = vmul.f32 %v714, 0.25
        %v745 = vadd.f32 %v721, %v733
        %v746 = vadd.f32 %v722, %v734
        %v747 = vadd.f32 %v723, %v735
        %v748 = vadd.f32 %v724, %v736
        %v749 = vadd.f32 %v725, %v737
        %v750 = vadd.f32 %v726, %v738
        %v751 = vadd.f32 %v727, %v739
        %v752 = vadd.f32 %v728, %v740
        %v753 = vadd.f32 %v729, %v741
        %v754 = vadd.f32 %v730, %v742
        %v755 = vadd.f32 %v731, %v743
        %v756 = vadd.f32 %v732, %v744
        %v757 = vmul.f32 %v715, 0.25
        %v758 = vmul.f32 %v716, 0.25
        %v759 = vmul.f32 %v717, 0.25
        %v760 = vmul.f32 %v718, 0.25
        %v761 = vmul.f32 %v719, 0.25
        %v762 = vmul.f32 %v720, 0.25
        %v763 = vadd.f32 %v721, %v739
        %v764 = vadd.f32 %v722, %v740
        %v765 = vadd.f32 %v723, %v741
        %v766 = vadd.f32 %v724, %v742
        %v767 = vadd.f32 %v725, %v743
        %v768 = vadd.f32 %v726, %v744
        %v769 = vadd.f32 %v727, %v757
        %v770 = vadd.f32 %v728, %v758
        %v771 = vadd.f32 %v729, %v759
        %v772 = vadd.f32 %v730, %v760
        %v773 = vadd.f32 %v731, %v761
        %v774 = vadd.f32 %v732, %v762
        %v775 = vmul.f32 %v745, 0.75
        %v776 = vmul.f32 %v746, 0.75
        %v777 = vmul.f32 %v747, 0.75
        %v778 = vmul.f32 %v748, 0.75
        %v779 = vmul.f32 %v749, 0.75
        %v780 = vmul.f32 %v750, 0.75
        %v781 = vmul.f32 %v751, 0.75
        %v782 = vmul.f32 %v752, 0.75
        %v783 = vmul.f32 %v753, 0.75
        %v784 = vmul.f32 %v754, 0.75
        %v785 = vmul.f32 %v755, 0.75
        %v786 = vmul.f32 %v756, 0.75
        %v787 = vmul.f32 %v745, 0.25
        %v788 = vmul.f32 %v746, 0.25
        %v789 = vmul.f32 %v748, 0.25
        %v790 = vmul.f32 %v749, 0.25
        %v791 = vmul.f32 %v751, 0.25
        %v792 = vmul.f32 %v752, 0.25
        %v793 = vmul.f32 %v754, 0.25
        %v794 = vmul.f32 %v755, 0.25
        %vm803 = vcmask 1040384
        %v804 = vrot.slane %v787, 7
        %v805 = vrot.slane %v788, 7
        %v806 = vsel %vm803, %v804, %v805
        %v807 = vrot.slane %v789, 7
        %v808 = vrot.slane %v790, 7
        %v809 = vsel %vm803, %v807, %v808
        %v810 = vrot.slane %v791, 7
        %v811 = vrot.slane %v792, 7
        %v812 = vsel %vm803, %v810, %v811
        %v813 = vrot.slane %v793, 7
        %v814 = vrot.slane %v794, 7
        %v815 = vsel %vm803, %v813, %v814
        %v828 = vadd.f32 %v775, %v804
        %v829 = vadd.f32 %v776, %v806
        %v830 = vadd.f32 %v777, %v805
        %v831 = vadd.f32 %v778, %v807
        %v832 = vadd.f32 %v779, %v809
        %v833 = vadd.f32 %v780, %v808
        %v834 = vadd.f32 %v781, %v810
        %v835 = vadd.f32 %v782, %v812
        %v836 = vadd.f32 %v783, %v811
        %v837 = vadd.f32 %v784, %v813
        %v838 = vadd.f32 %v785, %v815
        %v839 = vadd.f32 %v786, %v814
        %vm840 = vcmask 64513
        %841 = vst.msk [vmem:[%s307 - $0x1] sm:$0xfe] %vm840, %v828
        %842 = vst.msk [vmem:[%s307 + $0x7] sm:$0xff] %vm498, %v829
        %843 = vst.msk [vmem:[%s307 + $0xf] sm:$0x1] %vm684, %v830
        %844 = vst.msk [vmem:[%s307 + $0x1f] sm:$0xfe] %vm840, %v831
        %845 = vst.msk [vmem:[%s307 + $0x27] sm:$0xff] %vm498, %v832
        %846 = vst.msk [vmem:[%s307 + $0x2f] sm:$0x1] %vm684, %v833
        %847 = vst.msk [vmem:[%s307 + $0x3f] sm:$0xfe] %vm840, %v834
        %848 = vst.msk [vmem:[%s307 + $0x47] sm:$0xff] %vm498, %v835
        %849 = vst.msk [vmem:[%s307 + $0x4f] sm:$0x1] %vm684, %v836
        %850 = vst.msk [vmem:[%s307 + $0x5f] sm:$0xfe] %vm840, %v837
        %851 = vst.msk [vmem:[%s307 + $0x67] sm:$0xff] %vm498, %v838
        %852 = vst.msk [vmem:[%s307 + $0x6f] sm:$0x1] %vm684, %v839
        %v853 = vmul.f32 %v747, 0.25
        %v854 = vmul.f32 %v750, 0.25
        %v855 = vmul.f32 %v753, 0.25
        %v856 = vmul.f32 %v756, 0.25
        %vm861 = vcmask 1046528
        %v862 = vrot.slane %v787, 1
        %v863 = vrot.slane %v788, 1
        %v864 = vsel %vm861, %v862, %v863
        %v865 = vrot.slane %v853, 1
        %v866 = vsel %vm861, %v863, %v865
        %v867 = vrot.slane %v789, 1
        %v868 = vrot.slane %v790, 1
        %v869 = vsel %vm861, %v867, %v868
        %v870 = vrot.slane %v854, 1
        %v871 = vsel %vm861, %v868, %v870
        %v872 = vrot.slane %v791, 1
        %v873 = vrot.slane %v792, 1
        %v874 = vsel %vm861, %v872, %v873
        %v875 = vrot.slane %v855, 1
        %v876 = vsel %vm861, %v873, %v875
        %v877 = vrot.slane %v793, 1
        %v878 = vrot.slane %v794, 1
        %v879 = vsel %vm861, %v877, %v878
        %v880 = vrot.slane %v856, 1
        %v881 = vsel %vm861, %v878, %v880
        %v894 = vadd.f32 %v775, %v864
        %v895 = vadd.f32 %v776, %v866
        %v896 = vadd.f32 %v777, %v865
        %v897 = vadd.f32 %v778, %v869
        %v898 = vadd.f32 %v779, %v871
        %v899 = vadd.f32 %v780, %v870
        %v900 = vadd.f32 %v781, %v874
        %v901 = vadd.f32 %v782, %v876
        %v902 = vadd.f32 %v783, %v875
        %v903 = vadd.f32 %v784, %v879
        %v904 = vadd.f32 %v785, %v881
        %v905 = vadd.f32 %v786, %v880
        %918 = vrot.lane.b32.xlu0 %v894, 8
        %v919 = vpop.permute.xlu0 %918
        %920 = vrot.lane.b32.xlu0 %v895, 8
        %v921 = vpop.permute.xlu0 %920
        %922 = vrot.lane.b32.xlu0 %v896, 8
        %v923 = vpop.permute.xlu0 %922
        %924 = vrot.lane.b32.xlu0 %v897, 8
        %v925 = vpop.permute.xlu0 %924
        %926 = vrot.lane.b32.xlu0 %v898, 8
        %v927 = vpop.permute.xlu0 %926
        %928 = vrot.lane.b32.xlu0 %v899, 8
        %v929 = vpop.permute.xlu0 %928
        %930 = vrot.lane.b32.xlu0 %v900, 8
        %v931 = vpop.permute.xlu0 %930
        %932 = vrot.lane.b32.xlu0 %v901, 8
        %v933 = vpop.permute.xlu0 %932
        %934 = vrot.lane.b32.xlu0 %v902, 8
        %v935 = vpop.permute.xlu0 %934
        %936 = vrot.lane.b32.xlu0 %v903, 8
        %v937 = vpop.permute.xlu0 %936
        %938 = vrot.lane.b32.xlu0 %v904, 8
        %v939 = vpop.permute.xlu0 %938
        %940 = vrot.lane.b32.xlu0 %v905, 8
        %v941 = vpop.permute.xlu0 %940
        %vm954 = vcmask 130113
        %955 = vst.msk [vmem:[%s307 - $0x1] sm:$0xfe] %vm954, %v919
        %vm956 = vcmask 130112
        %957 = vst.msk [vmem:[%s307 + $0x7] sm:$0xff] %vm956, %v921
        %vm958 = vcmask 122944
        %959 = vst.msk [vmem:[%s307 + $0xf] sm:$0x1] %vm958, %v923
        %960 = vst.msk [vmem:[%s307 + $0x1f] sm:$0xfe] %vm954, %v925
        %961 = vst.msk [vmem:[%s307 + $0x27] sm:$0xff] %vm956, %v927
        %962 = vst.msk [vmem:[%s307 + $0x2f] sm:$0x1] %vm958, %v929
        %963 = vst.msk [vmem:[%s307 + $0x3f] sm:$0xfe] %vm954, %v931
        %964 = vst.msk [vmem:[%s307 + $0x47] sm:$0xff] %vm956, %v933
        %965 = vst.msk [vmem:[%s307 + $0x4f] sm:$0x1] %vm958, %v935
        %966 = vst.msk [vmem:[%s307 + $0x5f] sm:$0xfe] %vm954, %v937
        %967 = vst.msk [vmem:[%s307 + $0x67] sm:$0xff] %vm956, %v939
        %968 = vst.msk [vmem:[%s307 + $0x6f] sm:$0x1] %vm958, %v941
        %v969 = vmul.f32 %v763, 0.75
        %v970 = vmul.f32 %v764, 0.75
        %v971 = vmul.f32 %v765, 0.75
        %v972 = vmul.f32 %v766, 0.75
        %v973 = vmul.f32 %v767, 0.75
        %v974 = vmul.f32 %v768, 0.75
        %v975 = vmul.f32 %v769, 0.75
        %v976 = vmul.f32 %v770, 0.75
        %v977 = vmul.f32 %v771, 0.75
        %v978 = vmul.f32 %v772, 0.75
        %v979 = vmul.f32 %v773, 0.75
        %v980 = vmul.f32 %v774, 0.75
        %v981 = vmul.f32 %v763, 0.25
        %v982 = vmul.f32 %v764, 0.25
        %v983 = vmul.f32 %v766, 0.25
        %v984 = vmul.f32 %v767, 0.25
        %v985 = vmul.f32 %v769, 0.25
        %v986 = vmul.f32 %v770, 0.25
        %v987 = vmul.f32 %v772, 0.25
        %v988 = vmul.f32 %v773, 0.25
        %v997 = vrot.slane %v981, 7
        %v998 = vrot.slane %v982, 7
        %v999 = vsel %vm803, %v997, %v998
        %v1000 = vrot.slane %v983, 7
        %v1001 = vrot.slane %v984, 7
        %v1002 = vsel %vm803, %v1000, %v1001
        %v1003 = vrot.slane %v985, 7
        %v1004 = vrot.slane %v986, 7
        %v1005 = vsel %vm803, %v1003, %v1004
        %v1006 = vrot.slane %v987, 7
        %v1007 = vrot.slane %v988, 7
        %v1008 = vsel %vm803, %v1006, %v1007
        %v1021 = vadd.f32 %v969, %v997
        %v1022 = vadd.f32 %v970, %v999
        %v1023 = vadd.f32 %v971, %v998
        %v1024 = vadd.f32 %v972, %v1000
        %v1025 = vadd.f32 %v973, %v1002
        %v1026 = vadd.f32 %v974, %v1001
        %v1027 = vadd.f32 %v975, %v1003
        %v1028 = vadd.f32 %v976, %v1005
        %v1029 = vadd.f32 %v977, %v1004
        %v1030 = vadd.f32 %v978, %v1006
        %v1031 = vadd.f32 %v979, %v1008
        %v1032 = vadd.f32 %v980, %v1007
        %s1033 = scalar_lea.vmem %s307, 16 [#allocation3]
        %1034 = vst.msk [vmem:[%s1033 - $0x1] sm:$0xfe] %vm840, %v1021
        %1035 = vst.msk [vmem:[%s1033 + $0x7] sm:$0xff] %vm498, %v1022
        %1036 = vst.msk [vmem:[%s1033 + $0xf] sm:$0x1] %vm684, %v1023
        %1037 = vst.msk [vmem:[%s1033 + $0x1f] sm:$0xfe] %vm840, %v1024
        %1038 = vst.msk [vmem:[%s1033 + $0x27] sm:$0xff] %vm498, %v1025
        %1039 = vst.msk [vmem:[%s1033 + $0x2f] sm:$0x1] %vm684, %v1026
        %1040 = vst.msk [vmem:[%s1033 + $0x3f] sm:$0xfe] %vm840, %v1027
        %1041 = vst.msk [vmem:[%s1033 + $0x47] sm:$0xff] %vm498, %v1028
        %1042 = vst.msk [vmem:[%s1033 + $0x4f] sm:$0x1] %vm684, %v1029
        %1043 = vst.msk [vmem:[%s1033 + $0x5f] sm:$0xfe] %vm840, %v1030
        %1044 = vst.msk [vmem:[%s1033 + $0x67] sm:$0xff] %vm498, %v1031
        %1045 = vst.msk [vmem:[%s1033 + $0x6f] sm:$0x1] %vm684, %v1032
        %v1046 = vmul.f32 %v765, 0.25
        %v1047 = vmul.f32 %v768, 0.25
        %v1048 = vmul.f32 %v771, 0.25
        %v1049 = vmul.f32 %v774, 0.25
        %v1054 = vrot.slane %v981, 1
        %v1055 = vrot.slane %v982, 1
        %v1056 = vsel %vm861, %v1054, %v1055
        %v1057 = vrot.slane %v1046, 1
        %v1058 = vsel %vm861, %v1055, %v1057
        %v1059 = vrot.slane %v983, 1
        %v1060 = vrot.slane %v984, 1
        %v1061 = vsel %vm861, %v1059, %v1060
        %v1062 = vrot.slane %v1047, 1
        %v1063 = vsel %vm861, %v1060, %v1062
        %v1064 = vrot.slane %v985, 1
        %v1065 = vrot.slane %v986, 1
        %v1066 = vsel %vm861, %v1064, %v1065
        %v1067 = vrot.slane %v1048, 1
        %v1068 = vsel %vm861, %v1065, %v1067
        %v1069 = vrot.slane %v987, 1
        %v1070 = vrot.slane %v988, 1
        %v1071 = vsel %vm861, %v1069, %v1070
        %v1072 = vrot.slane %v1049, 1
        %v1073 = vsel %vm861, %v1070, %v1072
        %v1086 = vadd.f32 %v969, %v1056
        %v1087 = vadd.f32 %v970, %v1058
        %v1088 = vadd.f32 %v971, %v1057
        %v1089 = vadd.f32 %v972, %v1061
        %v1090 = vadd.f32 %v973, %v1063
        %v1091 = vadd.f32 %v974, %v1062
        %v1092 = vadd.f32 %v975, %v1066
        %v1093 = vadd.f32 %v976, %v1068
        %v1094 = vadd.f32 %v977, %v1067
        %v1095 = vadd.f32 %v978, %v1071
        %v1096 = vadd.f32 %v979, %v1073
        %v1097 = vadd.f32 %v980, %v1072
        %1110 = vrot.lane.b32.xlu0 %v1086, 8
        %v1111 = vpop.permute.xlu0 %1110
        %1112 = vrot.lane.b32.xlu0 %v1087, 8
        %v1113 = vpop.permute.xlu0 %1112
        %1114 = vrot.lane.b32.xlu0 %v1088, 8
        %v1115 = vpop.permute.xlu0 %1114
        %1116 = vrot.lane.b32.xlu0 %v1089, 8
        %v1117 = vpop.permute.xlu0 %1116
        %1118 = vrot.lane.b32.xlu0 %v1090, 8
        %v1119 = vpop.permute.xlu0 %1118
        %1120 = vrot.lane.b32.xlu0 %v1091, 8
        %v1121 = vpop.permute.xlu0 %1120
        %1122 = vrot.lane.b32.xlu0 %v1092, 8
        %v1123 = vpop.permute.xlu0 %1122
        %1124 = vrot.lane.b32.xlu0 %v1093, 8
        %v1125 = vpop.permute.xlu0 %1124
        %1126 = vrot.lane.b32.xlu0 %v1094, 8
        %v1127 = vpop.permute.xlu0 %1126
        %1128 = vrot.lane.b32.xlu0 %v1095, 8
        %v1129 = vpop.permute.xlu0 %1128
        %1130 = vrot.lane.b32.xlu0 %v1096, 8
        %v1131 = vpop.permute.xlu0 %1130
        %1132 = vrot.lane.b32.xlu0 %v1097, 8
        %v1133 = vpop.permute.xlu0 %1132
        %1146 = vst.msk [vmem:[%s1033 - $0x1] sm:$0xfe] %vm954, %v1111
        %1147 = vst.msk [vmem:[%s1033 + $0x7] sm:$0xff] %vm956, %v1113
        %1148 = vst.msk [vmem:[%s1033 + $0xf] sm:$0x1] %vm958, %v1115
        %1149 = vst.msk [vmem:[%s1033 + $0x1f] sm:$0xfe] %vm954, %v1117
        %1150 = vst.msk [vmem:[%s1033 + $0x27] sm:$0xff] %vm956, %v1119
        %1151 = vst.msk [vmem:[%s1033 + $0x2f] sm:$0x1] %vm958, %v1121
        %1152 = vst.msk [vmem:[%s1033 + $0x3f] sm:$0xfe] %vm954, %v1123
        %1153 = vst.msk [vmem:[%s1033 + $0x47] sm:$0xff] %vm956, %v1125
        %1154 = vst.msk [vmem:[%s1033 + $0x4f] sm:$0x1] %vm958, %v1127
        %1155 = vst.msk [vmem:[%s1033 + $0x5f] sm:$0xfe] %vm954, %v1129
        %1156 = vst.msk [vmem:[%s1033 + $0x67] sm:$0xff] %vm956, %v1131
        %1157 = vst.msk [vmem:[%s1033 + $0x6f] sm:$0x1] %vm958, %v1133
        %s1158 = sand.u32 %s161, 1
        %s1159 = scalar_lea.sflag [#allocation4], %s1158
        %s1160 = sand.u32 %s161, 1
        %s1161 = smul.addr %s1160, 128
        %s1162 = scalar_lea.vmem [#allocation3], %s1161
        // Predicated region
        $region37: #{tpu_custom_call.1} parent=35 // pred_check
          %p1163 = pneg %p171
        $region38: #{tpu_custom_call.1} parent=35 // pred_check_branch
          %1165 = sbr.rel (%p1163) target = $region40
        $region39: #{tpu_custom_call.1} parent=35 // pred_region
          %s1166 = smul.u32 4, %s23
          %s1168 = ssub.s32 2048, 2048
          %1169 = vsyncadd %s1159, %s1168
          %s1170 = smul.addr %s1166, 4
          %s1171 = smul.addr %s22, 64
          %s1172 = sadd.s32 %s1170, %s1171
          %s1173 = smul.addr %s1172, 128
          %s1174 = scalar_lea.hbm %s4, %s1173
          %s1175 = sshll.u32 %s1162, 4
          %s1176 = int_to_ptr.vmem [resolvable:$true] %s1175
          %1181 = dma.vmem_to_hbm [thread:$0]  %s1176, 2048, %s1174, %s1159, 128, 128, 8
        $region40: #{tpu_custom_call.1} parent=35 // pred_fallthru
          _
      $region36: #{tpu_custom_call.1} parent=5 // pred_fallthru
        _
      %p1182 = scmp.le.s32.totalorder 2, %s13
      // Predicated region
      $region41: #{tpu_custom_call.1} parent=5 // pred_check
        %p1183 = pneg %p1182
      $region42: #{tpu_custom_call.1} parent=5 // pred_check_branch
        %1185 = sbr.rel (%p1183) target = $region44
      $region43: #{tpu_custom_call.1} parent=5 // pred_region
        %s1186 = ssub.s32 %s13, 2
        // Predicated region
        $region45: #{tpu_custom_call.1} parent=43 // pred_check
          %p1187 = pneg %p177
        $region46: #{tpu_custom_call.1} parent=43 // pred_check_branch
          %1189 = sbr.rel (%p1187) target = $region48
        $region47: #{tpu_custom_call.1} parent=43 // pred_region
          %s1190 = sand.u32 %s162, 1
          %s1191 = scalar_lea.sflag [#allocation4], %s1190
          %s1192 = sand.u32 %s162, 1
          %s1193 = smul.addr %s1192, 128
          %s1194 = scalar_lea.vmem [#allocation3], %s1193
          %1195 = dma.done %s1191, 2048
        $region48: #{tpu_custom_call.1} parent=43 // pred_fallthru
          _
      $region44: #{tpu_custom_call.1} parent=5 // pred_fallthru
        _
    $region6: #{tpu_custom_call.1} parent=1 // loop_footer
      %s17 = sadd.s32 1, %s13
    $region7: #{tpu_custom_call.1} parent=1 // loop_footer_branch
      %12 = sbr.rel target = $region3
    $region8: #{tpu_custom_call.1} parent=1 // loop_exit
      _
    %1196 = vsyncpa [#allocation4], 1
    %s1197 = scalar_lea.sflag [#allocation4], 1
    %1198 = vsyncpa %s1197, 1

</llo_original>
